<compile_context>
chip_gen: v5e
topology: v5e:2x2
jax: 0.10.0
libtpu: 0.0.40
codegen_flags: <defaults>
</compile_context>

<pallas_src>
import math
import functools

import jax
import jax.numpy as jnp
from jax.experimental import pallas as pl
from jax.experimental.pallas import tpu as pltpu

LN_EPS = 1e-5      # torch.nn.LayerNorm default eps
NEG_INF = -1e30    # additive mask bias


# ----------------------------- GELU variants ------------------------------ #
def _gelu_exact(x):
    # Matches torch.nn.GELU() default (erf-based).
    return 0.5 * x * (1.0 + jax.scipy.special.erf(x * (1.0 / math.sqrt(2.0))))


def _gelu_tanh(x):
    # tanh approximation, only used if erf has no Mosaic lowering on this jax.
    c = math.sqrt(2.0 / math.pi)
    return 0.5 * x * (1.0 + jnp.tanh(c * (x + 0.044715 * x * x * x)))


def _erf_lowers_in_pallas():
    """Probe whether erf lowers inside a Pallas TPU kernel."""
    def k(x_ref, o_ref):
        o_ref[...] = jax.scipy.special.erf(x_ref[...])
    try:
        f = pl.pallas_call(k, out_shape=jax.ShapeDtypeStruct((8, 128), jnp.float32))
        jax.block_until_ready(f(jnp.zeros((8, 128), jnp.float32)))
        return True
    except Exception:
        return False


# ------------------------------- helpers ----------------------------------- #
def _layernorm(x, w, b):
    mu = jnp.mean(x, axis=-1, keepdims=True)
    xc = x - mu
    var = jnp.mean(xc * xc, axis=-1, keepdims=True)
    return xc * jax.lax.rsqrt(var + LN_EPS) * w + b


def _bf16(x):
    return x.astype(jnp.bfloat16)


# ------------------------------- kernel ------------------------------------ #
def _block_kernel(x_ref, ln1w_ref, ln1b_ref, wqkv_ref, bqkv_ref,
                  wp_ref, bp_ref, ln2w_ref, ln2b_ref,
                  w1_ref, b1_ref, w2_ref, b2_ref,
                  o_ref, qkv_scr, *, n_head, t_cond, tq, gelu_fn):
    qi = pl.program_id(1)
    T = x_ref.shape[1]
    C = x_ref.shape[2]
    hd = C // n_head
    scale = 1.0 / math.sqrt(hd)

    # ---- once per batch element: ln1 + fused QKV over the full sequence ----
    @pl.when(qi == 0)
    def _():
        h = _layernorm(x_ref[0], ln1w_ref[...], ln1b_ref[...])          # (T, C) f32
        qkv = jnp.dot(_bf16(h), wqkv_ref[...],
                      preferred_element_type=jnp.float32) + bqkv_ref[...]  # (T, 3C)
        # Fold the 1/sqrt(hd) attention scale into the q columns.
        col = jax.lax.broadcasted_iota(jnp.int32, (1, 3 * C), 1)
        qkv_scr[...] = qkv * jnp.where(col < C, scale, 1.0)

    # ---- current query tile -------------------------------------------------
    row0 = pl.multiple_of(qi * tq, tq)
    x_tile = x_ref[0, pl.ds(row0, tq), :]            # (tq, C)  f32
    q_rows = qkv_scr[pl.ds(row0, tq), :]             # (tq, 3C) f32 (q cols used)
    kv_all = qkv_scr[...]                            # (T, 3C)  f32

    # Cross-conditional causal mask as an additive bias from 1-D iotas:
    # allowed iff (col % t) <= (row % t)  (== tril(t,t) tiled 3x3).
    rows = row0 + jax.lax.broadcasted_iota(jnp.int32, (tq, 1), 0)
    cols = jax.lax.broadcasted_iota(jnp.int32, (1, T), 1)
    bias = jnp.where((cols % t_cond) <= (rows % t_cond), 0.0, NEG_INF)   # (tq, T)

    # ---- attention: per-head, accumulated through the output projection ----
    acc = jnp.zeros((tq, C), jnp.float32)
    for h in range(n_head):                           # n_head is small & static
        qs = _bf16(q_rows[:, h * hd:(h + 1) * hd])                        # (tq, hd)
        ks = _bf16(kv_all[:, C + h * hd:C + (h + 1) * hd])                # (T, hd)
        vs = _bf16(kv_all[:, 2 * C + h * hd:2 * C + (h + 1) * hd])        # (T, hd)
        att = jax.lax.dot_general(qs, ks, (((1,), (1,)), ((), ())),
                                  preferred_element_type=jnp.float32)     # (tq, T)
        att = att + bias
        att = att - jnp.max(att, axis=-1, keepdims=True)
        p = jnp.exp(att)
        p = p * pl.reciprocal(jnp.sum(p, axis=-1, keepdims=True), approx=True)
        yh = jnp.dot(_bf16(p), vs, preferred_element_type=jnp.float32)    # (tq, hd)
        acc = acc + jnp.dot(_bf16(yh), _bf16(wp_ref[h * hd:(h + 1) * hd, :]),
                            preferred_element_type=jnp.float32)
    x1 = x_tile + acc + bp_ref[...]                   # residual 1

    # ---- ln2 + MLP -----------------------------------------------------------
    h2 = _layernorm(x1, ln2w_ref[...], ln2b_ref[...])
    m = jnp.dot(_bf16(h2), w1_ref[...],
                preferred_element_type=jnp.float32) + b1_ref[...]
    m = gelu_fn(m)
    m = jnp.dot(_bf16(m), w2_ref[...],
                preferred_element_type=jnp.float32) + b2_ref[...]
    o_ref[0] = (x1 + m).astype(o_ref.dtype)           # residual 2


# ------------------------------- wrapper ------------------------------------ #
def block_forward(x, params, n_head, gelu_fn, q_tile=None):
    B, T, C = x.shape
    assert T % 3 == 0 and C % n_head == 0
    if q_tile is None:
        q_tile = T
    assert T % q_tile == 0 and (q_tile % 8 == 0 or q_tile == T)
    nq = T // q_tile

    bf = jnp.bfloat16
    # Fused QKV weight/bias (host-side); matmul weights cast to bf16 host-side.
    wqkv = jnp.concatenate([params["wq"], params["wk"], params["wv"]], axis=1).astype(bf)
    bqkv = jnp.concatenate([params["bq"], params["bk"], params["bv"]], axis=1)
    plist = [params["ln1w"], params["ln1b"], wqkv, bqkv,
             params["wp"], params["bp"],          # wp kept f32 (sliced per head)
             params["ln2w"], params["ln2b"],
             params["w1"].astype(bf), params["b1"],
             params["w2"].astype(bf), params["b2"]]

    kernel = functools.partial(_block_kernel, n_head=n_head, t_cond=T // 3,
                               tq=q_tile, gelu_fn=gelu_fn)

    in_specs = [pl.BlockSpec((1, T, C), lambda b, qi: (b, 0, 0))]
    in_specs += [pl.BlockSpec(p.shape, lambda b, qi: (0, 0)) for p in plist]

    return pl.pallas_call(
        kernel,
        out_shape=jax.ShapeDtypeStruct((B, T, C), x.dtype),
        grid=(B, nq),
        in_specs=in_specs,
        out_specs=pl.BlockSpec((1, q_tile, C), lambda b, qi: (b, qi, 0)),
        scratch_shapes=[pltpu.VMEM((T, 3 * C), jnp.float32)],
        compiler_params=pltpu.CompilerParams(
            dimension_semantics=("parallel", "arbitrary")),
    )(x, *plist)


# --------------------------- plain-JAX references --------------------------- #
def block_reference(x, p, n_head, gelu_fn, mixed=True):
    """mixed=True mirrors the kernel's bf16 matmul casts; mixed=False is pure f32."""
    B, T, C = x.shape
    hd = C // n_head
    t = T // 3
    cast = (lambda z: z.astype(jnp.bfloat16)) if mixed else (lambda z: z)

    def mm(a, b):
        return jnp.dot(cast(a), cast(b), preferred_element_type=jnp.float32)

    def ln(z, w, b):
        mu = z.mean(-1, keepdims=True)
        var = ((z - mu) ** 2).mean(-1, keepdims=True)
        return (z - mu) / jnp.sqrt(var + LN_EPS) * w + b

    def heads(z):
        return z.reshape(B, T, n_head, hd).transpose(0, 2, 1, 3)

    h = ln(x, p["ln1w"], p["ln1b"])
    q = heads((mm(h, p["wq"]) + p["bq"]) * (1.0 / math.sqrt(hd)))
    k = heads(mm(h, p["wk"]) + p["bk"])
    v = heads(mm(h, p["wv"]) + p["bv"])
    att = jnp.einsum("bhqd,bhkd->bhqk", cast(q), cast(k),
                     preferred_element_type=jnp.float32)
    mask = jnp.tile(jnp.tril(jnp.ones((t, t), jnp.float32)), (3, 3))
    att = jnp.where(mask == 0, -jnp.inf, att)
    att = jax.nn.softmax(att, axis=-1)
    y = jnp.einsum("bhqk,bhkd->bhqd", cast(att), cast(v),
                   preferred_element_type=jnp.float32)
    y = y.transpose(0, 2, 1, 3).reshape(B, T, C)
    x = x + (mm(y, p["wp"]) + p["bp"])
    h2 = ln(x, p["ln2w"], p["ln2b"])
    m = gelu_fn(mm(h2, p["w1"]) + p["b1"])
    return x + (mm(m, p["w2"]) + p["b2"])


# ------------------------------ param init ---------------------------------- #
def init_params(key, n_embd):
    C = n_embd
    ks = jax.random.split(key, 16)

    def w(k, shape, scale=0.02):
        return jax.random.normal(k, shape, jnp.float32) * scale

    return {
        "ln1w": 1.0 + 0.1 * jax.random.normal(ks[0], (1, C), jnp.float32),
        "ln1b": 0.1 * jax.random.normal(ks[1], (1, C), jnp.float32),
        "wq": w(ks[2], (C, C)), "bq": w(ks[3], (1, C)),
        "wk": w(ks[4], (C, C)), "bk": w(ks[5], (1, C)),
        "wv": w(ks[6], (C, C)), "bv": w(ks[7], (1, C)),
        "wp": w(ks[8], (C, C)), "bp": w(ks[9], (1, C)),
        "ln2w": 1.0 + 0.1 * jax.random.normal(ks[10], (1, C), jnp.float32),
        "ln2b": 0.1 * jax.random.normal(ks[11], (1, C), jnp.float32),
        "w1": w(ks[12], (C, 4 * C)), "b1": w(ks[13], (1, 4 * C)),
        "w2": w(ks[14], (4 * C, C)), "b2": w(ks[15], (1, C)),
    }


if __name__ == "__main__":
    # Small config: n_embd=32, n_head=4, per-condition length t=8 -> T = 3*t = 24.
    B, n_head, n_embd, t = 2, 4, 32, 8
    T = 3 * t

    key = jax.random.PRNGKey(0)
    kx, kp = jax.random.split(key)
    x = jax.random.normal(kx, (B, T, n_embd), jnp.float32)
    params = init_params(kp, n_embd)

    if _erf_lowers_in_pallas():
        gelu_fn = _gelu_exact
    else:
        # TODO(synk): erf has no Mosaic lowering on this jax build; using the tanh
        # GELU approximation (torch.nn.GELU() default is the exact erf form).
        gelu_fn = _gelu_tanh

    out = jax.block_until_ready(block_forward(x, params, n_head, gelu_fn, q_tile=8))

    ref_mixed = block_reference(x, params, n_head, gelu_fn, mixed=True)
    ref_f32 = block_reference(x, params, n_head, gelu_fn, mixed=False)

    assert out.shape == (B, T, n_embd) and out.dtype == jnp.float32
    err_mixed = float(jnp.max(jnp.abs(out - ref_mixed)))
    err_f32 = float(jnp.max(jnp.abs(out - ref_f32)))
    assert jnp.allclose(out, ref_mixed, atol=2e-3, rtol=2e-3), f"mixed max_err={err_mixed}"
    assert jnp.allclose(out, ref_f32, atol=2e-2, rtol=2e-2), f"f32 max_err={err_f32}"
    print("KERNEL_OK")
</pallas_src>

<mosaic_0001>
module attributes {stable_mosaic.version = 11 : i64} {
  func.func @k(%arg0: memref<8x128xf32, #tpu.memory_space<vmem>>, %arg1: memref<8x128xf32, #tpu.memory_space<vmem>>) attributes {dimension_semantics = [], scalar_prefetch = 0 : i64, scratch_operands = 0 : i64, tpu.core_type = #tpu.core_type<tc>} {
    %c0 = arith.constant 0 : index
    %c0_0 = arith.constant 0 : index
    %0 = vector.load %arg0[%c0, %c0_0] : memref<8x128xf32, #tpu.memory_space<vmem>>, vector<8x128xf32>
    %1 = math.erf %0 : vector<8x128xf32>
    %c0_1 = arith.constant 0 : index
    %c0_2 = arith.constant 0 : index
    %2 = vector.load %arg1[%c0_1, %c0_2] : memref<8x128xf32, #tpu.memory_space<vmem>>, vector<8x128xf32>
    tpu.vector_store %arg1[%c0_1, %c0_2], %1 {strides = array<i32>} : memref<8x128xf32, #tpu.memory_space<vmem>>, vector<8x128xf32>,
    return
  }
}

module attributes {stable_mosaic.version = 11 : i64} {
  func.func @_block_kernel(%arg0: i32, %arg1: i32, %arg2: memref<1x24x32xf32, #tpu.memory_space<vmem>>, %arg3: memref<1x32xf32, #tpu.memory_space<vmem>>, %arg4: memref<1x32xf32, #tpu.memory_space<vmem>>, %arg5: memref<32x96xbf16, #tpu.memory_space<vmem>>, %arg6: memref<1x96xf32, #tpu.memory_space<vmem>>, %arg7: memref<32x32xf32, #tpu.memory_space<vmem>>, %arg8: memref<1x32xf32, #tpu.memory_space<vmem>>, %arg9: memref<1x32xf32, #tpu.memory_space<vmem>>, %arg10: memref<1x32xf32, #tpu.memory_space<vmem>>, %arg11: memref<32x128xbf16, #tpu.memory_space<vmem>>, %arg12: memref<1x128xf32, #tpu.memory_space<vmem>>, %arg13: memref<128x32xbf16, #tpu.memory_space<vmem>>, %arg14: memref<1x32xf32, #tpu.memory_space<vmem>>, %arg15: memref<1x8x32xf32, #tpu.memory_space<vmem>>, %arg16: memref<24x96xf32, #tpu.memory_space<vmem>>) attributes {dimension_semantics = [#tpu.dimension_semantics<parallel>, #tpu.dimension_semantics<arbitrary>], iteration_bounds = array<i64: 2, 3>, scalar_prefetch = 0 : i64, scratch_operands = 1 : i64, tpu.core_type = #tpu.core_type<tc>, window_params = [{transform_indices = @transform_0, window_bounds = array<i64: 1, 24, 32>}, {pipeline_mode = #tpu.pipeline_mode<synchronous>, transform_indices = @transform_1, window_bounds = array<i64: 1, 32>}, {pipeline_mode = #tpu.pipeline_mode<synchronous>, transform_indices = @transform_2, window_bounds = array<i64: 1, 32>}, {pipeline_mode = #tpu.pipeline_mode<synchronous>, transform_indices = @transform_3, window_bounds = array<i64: 32, 96>}, {pipeline_mode = #tpu.pipeline_mode<synchronous>, transform_indices = @transform_4, window_bounds = array<i64: 1, 96>}, {pipeline_mode = #tpu.pipeline_mode<synchronous>, transform_indices = @transform_5, window_bounds = array<i64: 32, 32>}, {pipeline_mode = #tpu.pipeline_mode<synchronous>, transform_indices = @transform_6, window_bounds = array<i64: 1, 32>}, {pipeline_mode = #tpu.pipeline_mode<synchronous>, transform_indices = @transform_7, window_bounds = array<i64: 1, 32>}, {pipeline_mode = #tpu.pipeline_mode<synchronous>, transform_indices = @transform_8, window_bounds = array<i64: 1, 32>}, {pipeline_mode = #tpu.pipeline_mode<synchronous>, transform_indices = @transform_9, window_bounds = array<i64: 32, 128>}, {pipeline_mode = #tpu.pipeline_mode<synchronous>, transform_indices = @transform_10, window_bounds = array<i64: 1, 128>}, {pipeline_mode = #tpu.pipeline_mode<synchronous>, transform_indices = @transform_11, window_bounds = array<i64: 128, 32>}, {pipeline_mode = #tpu.pipeline_mode<synchronous>, transform_indices = @transform_12, window_bounds = array<i64: 1, 32>}, {transform_indices = @transform_13, window_bounds = array<i64: 1, 8, 32>}]} {
    %c0_i32 = arith.constant 0 : i32
    %0 = arith.cmpi eq, %arg1, %c0_i32 : i32
    %1 = arith.extui %0 : i1 to i32
    %c0_i32_0 = arith.constant 0 : i32
    %2 = arith.cmpi ne, %1, %c0_i32_0 : i32
    scf.if %2 {
      %c0_71 = arith.constant 0 : index
      %c0_72 = arith.constant 0 : index
      %c0_73 = arith.constant 0 : index
      %209 = vector.load %arg2[%c0_71, %c0_72, %c0_73] : memref<1x24x32xf32, #tpu.memory_space<vmem>>, vector<1x24x32xf32>
      %210 = vector.shape_cast %209 : vector<1x24x32xf32> to vector<24x32xf32>
      %c0_74 = arith.constant 0 : index
      %c0_75 = arith.constant 0 : index
      %211 = vector.load %arg3[%c0_74, %c0_75] : memref<1x32xf32, #tpu.memory_space<vmem>>, vector<1x32xf32>
      %c0_76 = arith.constant 0 : index
      %c0_77 = arith.constant 0 : index
      %212 = vector.load %arg4[%c0_76, %c0_77] : memref<1x32xf32, #tpu.memory_space<vmem>>, vector<1x32xf32>
      %cst_78 = arith.constant dense<0.000000e+00> : vector<24xf32>
      %213 = vector.multi_reduction <add>, %210, %cst_78 [1] : vector<24x32xf32> to vector<24xf32>
      %214 = vector.shape_cast %213 : vector<24xf32> to vector<24x1xf32>
      %cst_79 = arith.constant 3.200000e+01 : f32
      %215 = vector.broadcast %cst_79 : f32 to vector<24x1xf32>
      %216 = arith.divf %214, %215 : vector<24x1xf32>
      %217 = vector.broadcast %216 : vector<24x1xf32> to vector<24x32xf32>
      %218 = arith.subf %210, %217 : vector<24x32xf32>
      %219 = arith.mulf %218, %218 : vector<24x32xf32>
      %cst_80 = arith.constant dense<0.000000e+00> : vector<24xf32>
      %220 = vector.multi_reduction <add>, %219, %cst_80 [1] : vector<24x32xf32> to vector<24xf32>
      %221 = vector.shape_cast %220 : vector<24xf32> to vector<24x1xf32>
      %cst_81 = arith.constant 3.200000e+01 : f32
      %222 = vector.broadcast %cst_81 : f32 to vector<24x1xf32>
      %223 = arith.divf %221, %222 : vector<24x1xf32>
      %cst_82 = arith.constant 9.99999974E-6 : f32
      %224 = vector.broadcast %cst_82 : f32 to vector<24x1xf32>
      %225 = arith.addf %223, %224 : vector<24x1xf32>
      %226 = math.rsqrt %225 : vector<24x1xf32>
      %227 = vector.broadcast %226 : vector<24x1xf32> to vector<24x32xf32>
      %228 = arith.mulf %218, %227 : vector<24x32xf32>
      %229 = vector.broadcast %211 : vector<1x32xf32> to vector<24x32xf32>
      %230 = arith.mulf %228, %229 : vector<24x32xf32>
      %231 = vector.broadcast %212 : vector<1x32xf32> to vector<24x32xf32>
      %232 = arith.addf %230, %231 : vector<24x32xf32>
      %233 = arith.truncf %232 : vector<24x32xf32> to vector<24x32xbf16>
      %c0_83 = arith.constant 0 : index
      %c0_84 = arith.constant 0 : index
      %234 = vector.load %arg5[%c0_83, %c0_84] : memref<32x96xbf16, #tpu.memory_space<vmem>>, vector<32x96xbf16>
      %cst_85 = arith.constant dense<0.000000e+00> : vector<24x96xf32>
      %235 = tpu.matmul %233, %234, %cst_85 {dimension_numbers = #tpu.dot_dimension_numbers<[1], [0], [0], [1], [0, 0, 1, 1], [], []>} : vector<24x32xbf16>, vector<32x96xbf16>, vector<24x96xf32> -> vector<24x96xf32>
      %c0_86 = arith.constant 0 : index
      %c0_87 = arith.constant 0 : index
      %236 = vector.load %arg6[%c0_86, %c0_87] : memref<1x96xf32, #tpu.memory_space<vmem>>, vector<1x96xf32>
      %237 = vector.broadcast %236 : vector<1x96xf32> to vector<24x96xf32>
      %238 = arith.addf %235, %237 : vector<24x96xf32>
      %239 = tpu.iota {dimensions = array<i32: 1>} : vector<1x96xi32>
      %c32_i32 = arith.constant 32 : i32
      %240 = vector.broadcast %c32_i32 : i32 to vector<1x96xi32>
      %241 = arith.cmpi slt, %239, %240 : vector<1x96xi32>
      %cst_88 = arith.constant 0.353553385 : f32
      %cst_89 = arith.constant 1.000000e+00 : f32
      %242 = vector.broadcast %cst_88 : f32 to vector<1x96xf32>
      %243 = vector.broadcast %cst_89 : f32 to vector<1x96xf32>
      %244 = arith.select %241, %242, %243 : vector<1x96xi1>, vector<1x96xf32>
      %245 = vector.broadcast %244 : vector<1x96xf32> to vector<24x96xf32>
      %246 = arith.mulf %238, %245 : vector<24x96xf32>
      %c0_90 = arith.constant 0 : index
      %c0_91 = arith.constant 0 : index
      %247 = vector.load %arg16[%c0_90, %c0_91] : memref<24x96xf32, #tpu.memory_space<vmem>>, vector<24x96xf32>
      tpu.vector_store %arg16[%c0_90, %c0_91], %246 {strides = array<i32>} : memref<24x96xf32, #tpu.memory_space<vmem>>, vector<24x96xf32>,
    } else {
    }
    %c8_i32 = arith.constant 8 : i32
    %3 = arith.muli %arg1, %c8_i32 : i32
    %4 = tpu.assume_multiple %3, 8 : i32
    %c0 = arith.constant 0 : index
    %5 = arith.index_cast %4 : i32 to index
    %c0_1 = arith.constant 0 : index
    %6 = vector.load %arg2[%c0, %5, %c0_1] : memref<1x24x32xf32, #tpu.memory_space<vmem>>, vector<1x8x32xf32>
    %7 = vector.shape_cast %6 : vector<1x8x32xf32> to vector<8x32xf32>
    %8 = arith.index_cast %4 : i32 to index
    %c0_2 = arith.constant 0 : index
    %9 = vector.load %arg16[%8, %c0_2] : memref<24x96xf32, #tpu.memory_space<vmem>>, vector<8x96xf32>
    %c0_3 = arith.constant 0 : index
    %c0_4 = arith.constant 0 : index
    %10 = vector.load %arg16[%c0_3, %c0_4] : memref<24x96xf32, #tpu.memory_space<vmem>>, vector<24x96xf32>
    %11 = tpu.iota {dimensions = array<i32: 0>} : vector<8x1xi32>
    %12 = vector.broadcast %4 : i32 to vector<8x1xi32>
    %13 = arith.addi %12, %11 : vector<8x1xi32>
    %14 = tpu.iota {dimensions = array<i32: 1>} : vector<1x24xi32>
    %c8_i32_5 = arith.constant 8 : i32
    %c0_i32_6 = arith.constant 0 : i32
    %15 = arith.cmpi eq, %c8_i32_5, %c0_i32_6 : i32
    %c1_i32 = arith.constant 1 : i32
    %16 = arith.select %15, %c1_i32, %c8_i32_5 : i32
    %17 = vector.broadcast %16 : i32 to vector<1x24xi32>
    %18 = arith.remsi %14, %17 : vector<1x24xi32>
    %c0_i32_7 = arith.constant 0 : i32
    %19 = vector.broadcast %c0_i32_7 : i32 to vector<1x24xi32>
    %20 = arith.cmpi ne, %18, %19 : vector<1x24xi32>
    %c0_i32_8 = arith.constant 0 : i32
    %21 = vector.broadcast %c0_i32_8 : i32 to vector<1x24xi32>
    %22 = arith.cmpi slt, %18, %21 : vector<1x24xi32>
    %c0_i32_9 = arith.constant 0 : i32
    %23 = arith.cmpi slt, %16, %c0_i32_9 : i32
    %24 = vector.broadcast %23 : i1 to vector<1x24xi1>
    %25 = vector.broadcast %24 : vector<1x24xi1> to vector<1x24xi1>
    %26 = arith.xori %22, %25 : vector<1x24xi1>
    %27 = arith.andi %26, %20 : vector<1x24xi1>
    %28 = vector.broadcast %16 : i32 to vector<1x24xi32>
    %29 = arith.addi %18, %28 : vector<1x24xi32>
    %30 = arith.select %27, %29, %18 : vector<1x24xi1>, vector<1x24xi32>
    %c8_i32_10 = arith.constant 8 : i32
    %c0_i32_11 = arith.constant 0 : i32
    %31 = arith.cmpi eq, %c8_i32_10, %c0_i32_11 : i32
    %c1_i32_12 = arith.constant 1 : i32
    %32 = arith.select %31, %c1_i32_12, %c8_i32_10 : i32
    %33 = vector.broadcast %32 : i32 to vector<8x1xi32>
    %34 = arith.remsi %13, %33 : vector<8x1xi32>
    %c0_i32_13 = arith.constant 0 : i32
    %35 = vector.broadcast %c0_i32_13 : i32 to vector<8x1xi32>
    %36 = arith.cmpi ne, %34, %35 : vector<8x1xi32>
    %c0_i32_14 = arith.constant 0 : i32
    %37 = vector.broadcast %c0_i32_14 : i32 to vector<8x1xi32>
    %38 = arith.cmpi slt, %34, %37 : vector<8x1xi32>
    %c0_i32_15 = arith.constant 0 : i32
    %39 = arith.cmpi slt, %32, %c0_i32_15 : i32
    %40 = vector.broadcast %39 : i1 to vector<8x1xi1>
    %41 = vector.broadcast %40 : vector<8x1xi1> to vector<8x1xi1>
    %42 = arith.xori %38, %41 : vector<8x1xi1>
    %43 = arith.andi %42, %36 : vector<8x1xi1>
    %44 = vector.broadcast %32 : i32 to vector<8x1xi32>
    %45 = arith.addi %34, %44 : vector<8x1xi32>
    %46 = arith.select %43, %45, %34 : vector<8x1xi1>, vector<8x1xi32>
    %47 = vector.broadcast %30 : vector<1x24xi32> to vector<8x24xi32>
    %48 = vector.broadcast %46 : vector<8x1xi32> to vector<8x24xi32>
    %49 = arith.cmpi sle, %47, %48 : vector<8x24xi32>
    %cst = arith.constant 0.000000e+00 : f32
    %cst_16 = arith.constant -1.000000e+30 : f32
    %50 = vector.broadcast %cst : f32 to vector<8x24xf32>
    %51 = vector.broadcast %cst_16 : f32 to vector<8x24xf32>
    %52 = arith.select %49, %50, %51 : vector<8x24xi1>, vector<8x24xf32>
    %cst_17 = arith.constant 0.000000e+00 : f32
    %53 = vector.broadcast %cst_17 : f32 to vector<8x32xf32>
    %54 = vector.extract_strided_slice %9 {offsets = [0, 0], sizes = [8, 8], strides = [1, 1]} : vector<8x96xf32> to vector<8x8xf32>
    %55 = arith.truncf %54 : vector<8x8xf32> to vector<8x8xbf16>
    %56 = vector.extract_strided_slice %10 {offsets = [0, 32], sizes = [24, 8], strides = [1, 1]} : vector<24x96xf32> to vector<24x8xf32>
    %57 = arith.truncf %56 : vector<24x8xf32> to vector<24x8xbf16>
    %58 = vector.extract_strided_slice %10 {offsets = [0, 64], sizes = [24, 8], strides = [1, 1]} : vector<24x96xf32> to vector<24x8xf32>
    %59 = arith.truncf %58 : vector<24x8xf32> to vector<24x8xbf16>
    %cst_18 = arith.constant dense<0.000000e+00> : vector<8x24xf32>
    %60 = tpu.matmul %55, %57, %cst_18 {dimension_numbers = #tpu.dot_dimension_numbers<[1], [1], [0], [0], [0, 0, 1, 0], [], []>} : vector<8x8xbf16>, vector<24x8xbf16>, vector<8x24xf32> -> vector<8x24xf32>
    %61 = arith.addf %60, %52 : vector<8x24xf32>
    %cst_19 = arith.constant dense<0xFF800000> : vector<8xf32>
    %62 = vector.multi_reduction <maximumf>, %61, %cst_19 [1] : vector<8x24xf32> to vector<8xf32>
    %63 = vector.shape_cast %62 : vector<8xf32> to vector<8x1xf32>
    %64 = vector.broadcast %63 : vector<8x1xf32> to vector<8x24xf32>
    %65 = arith.subf %61, %64 : vector<8x24xf32>
    %66 = math.exp %65 : vector<8x24xf32>
    %cst_20 = arith.constant dense<0.000000e+00> : vector<8xf32>
    %67 = vector.multi_reduction <add>, %66, %cst_20 [1] : vector<8x24xf32> to vector<8xf32>
    %68 = vector.shape_cast %67 : vector<8xf32> to vector<8x1xf32>
    %69 = tpu.reciprocal %68 {approx = true} : vector<8x1xf32> -> vector<8x1xf32>
    %70 = vector.broadcast %69 : vector<8x1xf32> to vector<8x24xf32>
    %71 = arith.mulf %66, %70 : vector<8x24xf32>
    %72 = arith.truncf %71 : vector<8x24xf32> to vector<8x24xbf16>
    %cst_21 = arith.constant dense<0.000000e+00> : vector<8x8xf32>
    %73 = tpu.matmul %72, %59, %cst_21 {dimension_numbers = #tpu.dot_dimension_numbers<[1], [0], [0], [1], [0, 0, 1, 1], [], []>} : vector<8x24xbf16>, vector<24x8xbf16>, vector<8x8xf32> -> vector<8x8xf32>
    %74 = arith.truncf %73 : vector<8x8xf32> to vector<8x8xbf16>
    %c0_22 = arith.constant 0 : index
    %c0_23 = arith.constant 0 : index
    %75 = vector.load %arg7[%c0_22, %c0_23] : memref<32x32xf32, #tpu.memory_space<vmem>>, vector<8x32xf32>
    %76 = arith.truncf %75 : vector<8x32xf32> to vector<8x32xbf16>
    %cst_24 = arith.constant dense<0.000000e+00> : vector<8x32xf32>
    %77 = tpu.matmul %74, %76, %cst_24 {dimension_numbers = #tpu.dot_dimension_numbers<[1], [0], [0], [1], [0, 0, 1, 1], [], []>} : vector<8x8xbf16>, vector<8x32xbf16>, vector<8x32xf32> -> vector<8x32xf32>
    %78 = arith.addf %53, %77 : vector<8x32xf32>
    %79 = vector.extract_strided_slice %9 {offsets = [0, 8], sizes = [8, 8], strides = [1, 1]} : vector<8x96xf32> to vector<8x8xf32>
    %80 = arith.truncf %79 : vector<8x8xf32> to vector<8x8xbf16>
    %81 = vector.extract_strided_slice %10 {offsets = [0, 40], sizes = [24, 8], strides = [1, 1]} : vector<24x96xf32> to vector<24x8xf32>
    %82 = arith.truncf %81 : vector<24x8xf32> to vector<24x8xbf16>
    %83 = vector.extract_strided_slice %10 {offsets = [0, 72], sizes = [24, 8], strides = [1, 1]} : vector<24x96xf32> to vector<24x8xf32>
    %84 = arith.truncf %83 : vector<24x8xf32> to vector<24x8xbf16>
    %cst_25 = arith.constant dense<0.000000e+00> : vector<8x24xf32>
    %85 = tpu.matmul %80, %82, %cst_25 {dimension_numbers = #tpu.dot_dimension_numbers<[1], [1], [0], [0], [0, 0, 1, 0], [], []>} : vector<8x8xbf16>, vector<24x8xbf16>, vector<8x24xf32> -> vector<8x24xf32>
    %86 = arith.addf %85, %52 : vector<8x24xf32>
    %cst_26 = arith.constant dense<0xFF800000> : vector<8xf32>
    %87 = vector.multi_reduction <maximumf>, %86, %cst_26 [1] : vector<8x24xf32> to vector<8xf32>
    %88 = vector.shape_cast %87 : vector<8xf32> to vector<8x1xf32>
    %89 = vector.broadcast %88 : vector<8x1xf32> to vector<8x24xf32>
    %90 = arith.subf %86, %89 : vector<8x24xf32>
    %91 = math.exp %90 : vector<8x24xf32>
    %cst_27 = arith.constant dense<0.000000e+00> : vector<8xf32>
    %92 = vector.multi_reduction <add>, %91, %cst_27 [1] : vector<8x24xf32> to vector<8xf32>
    %93 = vector.shape_cast %92 : vector<8xf32> to vector<8x1xf32>
    %94 = tpu.reciprocal %93 {approx = true} : vector<8x1xf32> -> vector<8x1xf32>
    %95 = vector.broadcast %94 : vector<8x1xf32> to vector<8x24xf32>
    %96 = arith.mulf %91, %95 : vector<8x24xf32>
    %97 = arith.truncf %96 : vector<8x24xf32> to vector<8x24xbf16>
    %cst_28 = arith.constant dense<0.000000e+00> : vector<8x8xf32>
    %98 = tpu.matmul %97, %84, %cst_28 {dimension_numbers = #tpu.dot_dimension_numbers<[1], [0], [0], [1], [0, 0, 1, 1], [], []>} : vector<8x24xbf16>, vector<24x8xbf16>, vector<8x8xf32> -> vector<8x8xf32>
    %99 = arith.truncf %98 : vector<8x8xf32> to vector<8x8xbf16>
    %c8 = arith.constant 8 : index
    %c0_29 = arith.constant 0 : index
    %100 = vector.load %arg7[%c8, %c0_29] : memref<32x32xf32, #tpu.memory_space<vmem>>, vector<8x32xf32>
    %101 = arith.truncf %100 : vector<8x32xf32> to vector<8x32xbf16>
    %cst_30 = arith.constant dense<0.000000e+00> : vector<8x32xf32>
    %102 = tpu.matmul %99, %101, %cst_30 {dimension_numbers = #tpu.dot_dimension_numbers<[1], [0], [0], [1], [0, 0, 1, 1], [], []>} : vector<8x8xbf16>, vector<8x32xbf16>, vector<8x32xf32> -> vector<8x32xf32>
    %103 = arith.addf %78, %102 : vector<8x32xf32>
    %104 = vector.extract_strided_slice %9 {offsets = [0, 16], sizes = [8, 8], strides = [1, 1]} : vector<8x96xf32> to vector<8x8xf32>
    %105 = arith.truncf %104 : vector<8x8xf32> to vector<8x8xbf16>
    %106 = vector.extract_strided_slice %10 {offsets = [0, 48], sizes = [24, 8], strides = [1, 1]} : vector<24x96xf32> to vector<24x8xf32>
    %107 = arith.truncf %106 : vector<24x8xf32> to vector<24x8xbf16>
    %108 = vector.extract_strided_slice %10 {offsets = [0, 80], sizes = [24, 8], strides = [1, 1]} : vector<24x96xf32> to vector<24x8xf32>
    %109 = arith.truncf %108 : vector<24x8xf32> to vector<24x8xbf16>
    %cst_31 = arith.constant dense<0.000000e+00> : vector<8x24xf32>
    %110 = tpu.matmul %105, %107, %cst_31 {dimension_numbers = #tpu.dot_dimension_numbers<[1], [1], [0], [0], [0, 0, 1, 0], [], []>} : vector<8x8xbf16>, vector<24x8xbf16>, vector<8x24xf32> -> vector<8x24xf32>
    %111 = arith.addf %110, %52 : vector<8x24xf32>
    %cst_32 = arith.constant dense<0xFF800000> : vector<8xf32>
    %112 = vector.multi_reduction <maximumf>, %111, %cst_32 [1] : vector<8x24xf32> to vector<8xf32>
    %113 = vector.shape_cast %112 : vector<8xf32> to vector<8x1xf32>
    %114 = vector.broadcast %113 : vector<8x1xf32> to vector<8x24xf32>
    %115 = arith.subf %111, %114 : vector<8x24xf32>
    %116 = math.exp %115 : vector<8x24xf32>
    %cst_33 = arith.constant dense<0.000000e+00> : vector<8xf32>
    %117 = vector.multi_reduction <add>, %116, %cst_33 [1] : vector<8x24xf32> to vector<8xf32>
    %118 = vector.shape_cast %117 : vector<8xf32> to vector<8x1xf32>
    %119 = tpu.reciprocal %118 {approx = true} : vector<8x1xf32> -> vector<8x1xf32>
    %120 = vector.broadcast %119 : vector<8x1xf32> to vector<8x24xf32>
    %121 = arith.mulf %116, %120 : vector<8x24xf32>
    %122 = arith.truncf %121 : vector<8x24xf32> to vector<8x24xbf16>
    %cst_34 = arith.constant dense<0.000000e+00> : vector<8x8xf32>
    %123 = tpu.matmul %122, %109, %cst_34 {dimension_numbers = #tpu.dot_dimension_numbers<[1], [0], [0], [1], [0, 0, 1, 1], [], []>} : vector<8x24xbf16>, vector<24x8xbf16>, vector<8x8xf32> -> vector<8x8xf32>
    %124 = arith.truncf %123 : vector<8x8xf32> to vector<8x8xbf16>
    %c16 = arith.constant 16 : index
    %c0_35 = arith.constant 0 : index
    %125 = vector.load %arg7[%c16, %c0_35] : memref<32x32xf32, #tpu.memory_space<vmem>>, vector<8x32xf32>
    %126 = arith.truncf %125 : vector<8x32xf32> to vector<8x32xbf16>
    %cst_36 = arith.constant dense<0.000000e+00> : vector<8x32xf32>
    %127 = tpu.matmul %124, %126, %cst_36 {dimension_numbers = #tpu.dot_dimension_numbers<[1], [0], [0], [1], [0, 0, 1, 1], [], []>} : vector<8x8xbf16>, vector<8x32xbf16>, vector<8x32xf32> -> vector<8x32xf32>
    %128 = arith.addf %103, %127 : vector<8x32xf32>
    %129 = vector.extract_strided_slice %9 {offsets = [0, 24], sizes = [8, 8], strides = [1, 1]} : vector<8x96xf32> to vector<8x8xf32>
    %130 = arith.truncf %129 : vector<8x8xf32> to vector<8x8xbf16>
    %131 = vector.extract_strided_slice %10 {offsets = [0, 56], sizes = [24, 8], strides = [1, 1]} : vector<24x96xf32> to vector<24x8xf32>
    %132 = arith.truncf %131 : vector<24x8xf32> to vector<24x8xbf16>
    %133 = vector.extract_strided_slice %10 {offsets = [0, 88], sizes = [24, 8], strides = [1, 1]} : vector<24x96xf32> to vector<24x8xf32>
    %134 = arith.truncf %133 : vector<24x8xf32> to vector<24x8xbf16>
    %cst_37 = arith.constant dense<0.000000e+00> : vector<8x24xf32>
    %135 = tpu.matmul %130, %132, %cst_37 {dimension_numbers = #tpu.dot_dimension_numbers<[1], [1], [0], [0], [0, 0, 1, 0], [], []>} : vector<8x8xbf16>, vector<24x8xbf16>, vector<8x24xf32> -> vector<8x24xf32>
    %136 = arith.addf %135, %52 : vector<8x24xf32>
    %cst_38 = arith.constant dense<0xFF800000> : vector<8xf32>
    %137 = vector.multi_reduction <maximumf>, %136, %cst_38 [1] : vector<8x24xf32> to vector<8xf32>
    %138 = vector.shape_cast %137 : vector<8xf32> to vector<8x1xf32>
    %139 = vector.broadcast %138 : vector<8x1xf32> to vector<8x24xf32>
    %140 = arith.subf %136, %139 : vector<8x24xf32>
    %141 = math.exp %140 : vector<8x24xf32>
    %cst_39 = arith.constant dense<0.000000e+00> : vector<8xf32>
    %142 = vector.multi_reduction <add>, %141, %cst_39 [1] : vector<8x24xf32> to vector<8xf32>
    %143 = vector.shape_cast %142 : vector<8xf32> to vector<8x1xf32>
    %144 = tpu.reciprocal %143 {approx = true} : vector<8x1xf32> -> vector<8x1xf32>
    %145 = vector.broadcast %144 : vector<8x1xf32> to vector<8x24xf32>
    %146 = arith.mulf %141, %145 : vector<8x24xf32>
    %147 = arith.truncf %146 : vector<8x24xf32> to vector<8x24xbf16>
    %cst_40 = arith.constant dense<0.000000e+00> : vector<8x8xf32>
    %148 = tpu.matmul %147, %134, %cst_40 {dimension_numbers = #tpu.dot_dimension_numbers<[1], [0], [0], [1], [0, 0, 1, 1], [], []>} : vector<8x24xbf16>, vector<24x8xbf16>, vector<8x8xf32> -> vector<8x8xf32>
    %149 = arith.truncf %148 : vector<8x8xf32> to vector<8x8xbf16>
    %c24 = arith.constant 24 : index
    %c0_41 = arith.constant 0 : index
    %150 = vector.load %arg7[%c24, %c0_41] : memref<32x32xf32, #tpu.memory_space<vmem>>, vector<8x32xf32>
    %151 = arith.truncf %150 : vector<8x32xf32> to vector<8x32xbf16>
    %cst_42 = arith.constant dense<0.000000e+00> : vector<8x32xf32>
    %152 = tpu.matmul %149, %151, %cst_42 {dimension_numbers = #tpu.dot_dimension_numbers<[1], [0], [0], [1], [0, 0, 1, 1], [], []>} : vector<8x8xbf16>, vector<8x32xbf16>, vector<8x32xf32> -> vector<8x32xf32>
    %153 = arith.addf %128, %152 : vector<8x32xf32>
    %154 = arith.addf %7, %153 : vector<8x32xf32>
    %c0_43 = arith.constant 0 : index
    %c0_44 = arith.constant 0 : index
    %155 = vector.load %arg8[%c0_43, %c0_44] : memref<1x32xf32, #tpu.memory_space<vmem>>, vector<1x32xf32>
    %156 = vector.broadcast %155 : vector<1x32xf32> to vector<8x32xf32>
    %157 = arith.addf %154, %156 : vector<8x32xf32>
    %c0_45 = arith.constant 0 : index
    %c0_46 = arith.constant 0 : index
    %158 = vector.load %arg9[%c0_45, %c0_46] : memref<1x32xf32, #tpu.memory_space<vmem>>, vector<1x32xf32>
    %c0_47 = arith.constant 0 : index
    %c0_48 = arith.constant 0 : index
    %159 = vector.load %arg10[%c0_47, %c0_48] : memref<1x32xf32, #tpu.memory_space<vmem>>, vector<1x32xf32>
    %cst_49 = arith.constant dense<0.000000e+00> : vector<8xf32>
    %160 = vector.multi_reduction <add>, %157, %cst_49 [1] : vector<8x32xf32> to vector<8xf32>
    %161 = vector.shape_cast %160 : vector<8xf32> to vector<8x1xf32>
    %cst_50 = arith.constant 3.200000e+01 : f32
    %162 = vector.broadcast %cst_50 : f32 to vector<8x1xf32>
    %163 = arith.divf %161, %162 : vector<8x1xf32>
    %164 = vector.broadcast %163 : vector<8x1xf32> to vector<8x32xf32>
    %165 = arith.subf %157, %164 : vector<8x32xf32>
    %166 = arith.mulf %165, %165 : vector<8x32xf32>
    %cst_51 = arith.constant dense<0.000000e+00> : vector<8xf32>
    %167 = vector.multi_reduction <add>, %166, %cst_51 [1] : vector<8x32xf32> to vector<8xf32>
    %168 = vector.shape_cast %167 : vector<8xf32> to vector<8x1xf32>
    %cst_52 = arith.constant 3.200000e+01 : f32
    %169 = vector.broadcast %cst_52 : f32 to vector<8x1xf32>
    %170 = arith.divf %168, %169 : vector<8x1xf32>
    %cst_53 = arith.constant 9.99999974E-6 : f32
    %171 = vector.broadcast %cst_53 : f32 to vector<8x1xf32>
    %172 = arith.addf %170, %171 : vector<8x1xf32>
    %173 = math.rsqrt %172 : vector<8x1xf32>
    %174 = vector.broadcast %173 : vector<8x1xf32> to vector<8x32xf32>
    %175 = arith.mulf %165, %174 : vector<8x32xf32>
    %176 = vector.broadcast %158 : vector<1x32xf32> to vector<8x32xf32>
    %177 = arith.mulf %175, %176 : vector<8x32xf32>
    %178 = vector.broadcast %159 : vector<1x32xf32> to vector<8x32xf32>
    %179 = arith.addf %177, %178 : vector<8x32xf32>
    %180 = arith.truncf %179 : vector<8x32xf32> to vector<8x32xbf16>
    %c0_54 = arith.constant 0 : index
    %c0_55 = arith.constant 0 : index
    %181 = vector.load %arg11[%c0_54, %c0_55] : memref<32x128xbf16, #tpu.memory_space<vmem>>, vector<32x128xbf16>
    %cst_56 = arith.constant dense<0.000000e+00> : vector<8x128xf32>
    %182 = tpu.matmul %180, %181, %cst_56 {dimension_numbers = #tpu.dot_dimension_numbers<[1], [0], [0], [1], [0, 0, 1, 1], [], []>} : vector<8x32xbf16>, vector<32x128xbf16>, vector<8x128xf32> -> vector<8x128xf32>
    %c0_57 = arith.constant 0 : index
    %c0_58 = arith.constant 0 : index
    %183 = vector.load %arg12[%c0_57, %c0_58] : memref<1x128xf32, #tpu.memory_space<vmem>>, vector<1x128xf32>
    %184 = vector.broadcast %183 : vector<1x128xf32> to vector<8x128xf32>
    %185 = arith.addf %182, %184 : vector<8x128xf32>
    %cst_59 = arith.constant 5.000000e-01 : f32
    %186 = vector.broadcast %cst_59 : f32 to vector<8x128xf32>
    %187 = arith.mulf %186, %185 : vector<8x128xf32>
    %cst_60 = arith.constant 4.471500e-02 : f32
    %188 = vector.broadcast %cst_60 : f32 to vector<8x128xf32>
    %189 = arith.mulf %188, %185 : vector<8x128xf32>
    %190 = arith.mulf %189, %185 : vector<8x128xf32>
    %191 = arith.mulf %190, %185 : vector<8x128xf32>
    %192 = arith.addf %185, %191 : vector<8x128xf32>
    %cst_61 = arith.constant 0.797884583 : f32
    %193 = vector.broadcast %cst_61 : f32 to vector<8x128xf32>
    %194 = arith.mulf %193, %192 : vector<8x128xf32>
    %195 = math.tanh %194 : vector<8x128xf32>
    %cst_62 = arith.constant 1.000000e+00 : f32
    %196 = vector.broadcast %cst_62 : f32 to vector<8x128xf32>
    %197 = arith.addf %196, %195 : vector<8x128xf32>
    %198 = arith.mulf %187, %197 : vector<8x128xf32>
    %199 = arith.truncf %198 : vector<8x128xf32> to vector<8x128xbf16>
    %c0_63 = arith.constant 0 : index
    %c0_64 = arith.constant 0 : index
    %200 = vector.load %arg13[%c0_63, %c0_64] : memref<128x32xbf16, #tpu.memory_space<vmem>>, vector<128x32xbf16>
    %cst_65 = arith.constant dense<0.000000e+00> : vector<8x32xf32>
    %201 = tpu.matmul %199, %200, %cst_65 {dimension_numbers = #tpu.dot_dimension_numbers<[1], [0], [0], [1], [0, 0, 1, 1], [], []>} : vector<8x128xbf16>, vector<128x32xbf16>, vector<8x32xf32> -> vector<8x32xf32>
    %c0_66 = arith.constant 0 : index
    %c0_67 = arith.constant 0 : index
    %202 = vector.load %arg14[%c0_66, %c0_67] : memref<1x32xf32, #tpu.memory_space<vmem>>, vector<1x32xf32>
    %203 = vector.broadcast %202 : vector<1x32xf32> to vector<8x32xf32>
    %204 = arith.addf %201, %203 : vector<8x32xf32>
    %205 = arith.addf %157, %204 : vector<8x32xf32>
    %c0_68 = arith.constant 0 : index
    %c0_69 = arith.constant 0 : index
    %c0_70 = arith.constant 0 : index
    %206 = vector.load %arg15[%c0_68, %c0_69, %c0_70] : memref<1x8x32xf32, #tpu.memory_space<vmem>>, vector<1x8x32xf32>
    %207 = vector.shape_cast %206 : vector<1x8x32xf32> to vector<8x32xf32>
    %208 = vector.shape_cast %205 : vector<8x32xf32> to vector<1x8x32xf32>
    tpu.vector_store %arg15[%c0_68, %c0_69, %c0_70], %208 {strides = array<i32>} : memref<1x8x32xf32, #tpu.memory_space<vmem>>, vector<1x8x32xf32>,
    return
  }
  func.func @transform_0(%arg0: i32, %arg1: i32) -> (i32, i32, i32) {
    %c0_i32 = arith.constant 0 : i32
    %c0_i32_0 = arith.constant 0 : i32
    %c0_i32_1 = arith.constant 0 : i32
    return %arg0, %c0_i32, %c0_i32_0 : i32, i32, i32
  }
  func.func @transform_1(%arg0: i32, %arg1: i32) -> (i32, i32) {
    %c0_i32 = arith.constant 0 : i32
    %c0_i32_0 = arith.constant 0 : i32
    %c0_i32_1 = arith.constant 0 : i32
    return %c0_i32, %c0_i32_0 : i32, i32
  }
  func.func @transform_2(%arg0: i32, %arg1: i32) -> (i32, i32) {
    %c0_i32 = arith.constant 0 : i32
    %c0_i32_0 = arith.constant 0 : i32
    %c0_i32_1 = arith.constant 0 : i32
    return %c0_i32, %c0_i32_0 : i32, i32
  }
  func.func @transform_3(%arg0: i32, %arg1: i32) -> (i32, i32) {
    %c0_i32 = arith.constant 0 : i32
    %c0_i32_0 = arith.constant 0 : i32
    %c0_i32_1 = arith.constant 0 : i32
    return %c0_i32, %c0_i32_0 : i32, i32
  }
  func.func @transform_4(%arg0: i32, %arg1: i32) -> (i32, i32) {
    %c0_i32 = arith.constant 0 : i32
    %c0_i32_0 = arith.constant 0 : i32
    %c0_i32_1 = arith.constant 0 : i32
    return %c0_i32, %c0_i32_0 : i32, i32
  }
  func.func @transform_5(%arg0: i32, %arg1: i32) -> (i32, i32) {
    %c0_i32 = arith.constant 0 : i32
    %c0_i32_0 = arith.constant 0 : i32
    %c0_i32_1 = arith.constant 0 : i32
    return %c0_i32, %c0_i32_0 : i32, i32
  }
  func.func @transform_6(%arg0: i32, %arg1: i32) -> (i32, i32) {
    %c0_i32 = arith.constant 0 : i32
    %c0_i32_0 = arith.constant 0 : i32
    %c0_i32_1 = arith.constant 0 : i32
    return %c0_i32, %c0_i32_0 : i32, i32
  }
  func.func @transform_7(%arg0: i32, %arg1: i32) -> (i32, i32) {
    %c0_i32 = arith.constant 0 : i32
    %c0_i32_0 = arith.constant 0 : i32
    %c0_i32_1 = arith.constant 0 : i32
    return %c0_i32, %c0_i32_0 : i32, i32
  }
  func.func @transform_8(%arg0: i32, %arg1: i32) -> (i32, i32) {
    %c0_i32 = arith.constant 0 : i32
    %c0_i32_0 = arith.constant 0 : i32
    %c0_i32_1 = arith.constant 0 : i32
    return %c0_i32, %c0_i32_0 : i32, i32
  }
  func.func @transform_9(%arg0: i32, %arg1: i32) -> (i32, i32) {
    %c0_i32 = arith.constant 0 : i32
    %c0_i32_0 = arith.constant 0 : i32
    %c0_i32_1 = arith.constant 0 : i32
    return %c0_i32, %c0_i32_0 : i32, i32
  }
  func.func @transform_10(%arg0: i32, %arg1: i32) -> (i32, i32) {
    %c0_i32 = arith.constant 0 : i32
    %c0_i32_0 = arith.constant 0 : i32
    %c0_i32_1 = arith.constant 0 : i32
    return %c0_i32, %c0_i32_0 : i32, i32
  }
  func.func @transform_11(%arg0: i32, %arg1: i32) -> (i32, i32) {
    %c0_i32 = arith.constant 0 : i32
    %c0_i32_0 = arith.constant 0 : i32
    %c0_i32_1 = arith.constant 0 : i32
    return %c0_i32, %c0_i32_0 : i32, i32
  }
  func.func @transform_12(%arg0: i32, %arg1: i32) -> (i32, i32) {
    %c0_i32 = arith.constant 0 : i32
    %c0_i32_0 = arith.constant 0 : i32
    %c0_i32_1 = arith.constant 0 : i32
    return %c0_i32, %c0_i32_0 : i32, i32
  }
  func.func @transform_13(%arg0: i32, %arg1: i32) -> (i32, i32, i32) {
    %c0_i32 = arith.constant 0 : i32
    %c0_i32_0 = arith.constant 0 : i32
    return %arg0, %arg1, %c0_i32 : i32, i32, i32
  }
}

</mosaic_0001>

<llo_original>
// kernel: tpu_custom_call.1
$region0: #{tpu_custom_call.1}
  #allocation0 [shape = 'u32[]', space=smem, size = 0x4, offset = 0x4, fixed_abs, tag = 'smem constant byte address 0x4 - core index']
  #allocation1 [shape = 'u32[72,128]{1,0:T(1,128)}', space=vmem, size = 0x9000, scoped, tag = 'internal scratch']
  %s0 = inlined_call_operand.hbm [shape: f32[8,128], index: 0, kind: input, shape index: {}]
  %s1 = inlined_call_operand.hbm [shape: f32[8,128], index: 1, kind: output, shape index: {}]
  %s2 = sld [smem:[#allocation0]]
  $region18: #{tpu_custom_call.1} parent=0
    _
  %s4 = ssub.s32 1, %s2
  %s5 = scalar_select 0, %s4, %s2
  $region1: #{tpu_custom_call.1} parent=0
    #allocation2 [shape = 'u8[4096]{0}', space=vmem, size = 0x1000, scoped, tag = 'input window, operand 0, single buffered']
    #allocation3 [shape = 's32[1]{0}', space=sflag, size = 0x4, scoped, tag = 'scoped memory for tpu_custom_call.1']
    #allocation4 [shape = 's32[1]{0}', space=sflag, size = 0x4, scoped, tag = 'scoped memory for tpu_custom_call.1']
    #allocation5 [shape = 'u8[4096]{0}', space=vmem, size = 0x1000, scoped, tag = 'output window, operand 0, single buffered']
    %6 = vsyncpa [#allocation3], 0
    %7 = vsyncpa [#allocation4], 0
    // Predicated region
    $region2: #{tpu_custom_call.1} parent=1 // pred_check
      _
    $region3: #{tpu_custom_call.1} parent=1 // pred_check_branch
      %9 = sbr.rel (0) target = $region5
    $region4: #{tpu_custom_call.1} parent=1 // pred_region
      %11 = vsyncadd [#allocation3], 0
      %s13 = sshll.u32 %s0, 4
      %s14 = int_to_ptr.hbm [resolvable:$true] %s13
      %s15 = sshll.u32 [#allocation2], 4
      %s16 = int_to_ptr.vmem [resolvable:$true] %s15
      %18 = dma.hbm_to_vmem [thread:$0]  %s14, 128, %s16, [#allocation3]
    $region5: #{tpu_custom_call.1} parent=1 // pred_fallthru
      _
    // Predicated region
    $region6: #{tpu_custom_call.1} parent=1 // pred_check
      _
    $region7: #{tpu_custom_call.1} parent=1 // pred_check_branch
      %20 = sbr.rel (0) target = $region9
    $region8: #{tpu_custom_call.1} parent=1 // pred_region
      %22 = dma.done [#allocation3], 128
    $region9: #{tpu_custom_call.1} parent=1 // pred_fallthru
      _
    %v23 = vld [vmem:[#allocation2] sm:$0xff]
    %v24 = vmul.f32 %v23, %v23
    %v25 = vmin.f32 16.0, %v24
    %v26 = vmul.f32 %v25, 2.1237322e-06
    %v27 = vadd.f32 %v26, 0.00028619796
    %v28 = vmul.f32 %v25, %v27
    %v29 = vadd.f32 %v28, 0.0036580483
    %v30 = vmul.f32 %v25, %v29
    %v31 = vadd.f32 %v30, 0.05243302
    %v32 = vmul.f32 %v25, %v31
    %v33 = vadd.f32 %v32, 0.18741608
    %v34 = vmul.f32 %v25, %v33
    %v35 = vadd.f32 %v34, 1.1283791
    %v36 = vmul.f32 %v23, %v35
    %v37 = vmul.f32 %v25, 3.8918573e-05
    %v38 = vadd.f32 %v37, 0.001143296
    %v39 = vmul.f32 %v25, %v38
    %v40 = vadd.f32 %v39, 0.014752088
    %v41 = vmul.f32 %v25, %v40
    %v42 = vadd.f32 %v41, 0.112945676
    %v43 = vmul.f32 %v25, %v42
    %v44 = vadd.f32 %v43, 0.4994258
    %v45 = vmul.f32 %v25, %v44
    %v46 = vadd.f32 %v45, 1.0
    %v47 = vrcp.pop %v46
    %v48 = vmul.f32 %v46, %v47
    %v49 = vsub.f32 1.0, %v48
    %v50 = vmul.f32 %v47, %v49
    %v51 = vadd.f32 %v47, %v50
    %vm52 = vweird.f32 %v46
    %vm53 = vweird.f32 %v47
    %vm54 = vmor %vm52, %vm53
    %v55 = vsel %vm54, %v47, %v51
    %v56 = vand.u32 2147483647, %v46
    %vm57 = vcmp.eq.f32.partialorder %v56, 8.507059e+37
    %v58 = vand.u32 %v46, 2147483648
    %v59 = vor.u32 1.1754944e-38, %v58
    %v60 = vsel %vm57, %v59, %v55
    %v61 = vmul.f32 %v36, %v60
    %v62 = vmin.f32 %v61, 1.0
    %v63 = vmax.f32 %v62, -1.0
    %64 = vst [vmem:[#allocation5] sm:$0xff] %v63
    // Predicated region
    $region10: #{tpu_custom_call.1} parent=1 // pred_check
      _
    $region11: #{tpu_custom_call.1} parent=1 // pred_check_branch
      %66 = sbr.rel (0) target = $region13
    $region12: #{tpu_custom_call.1} parent=1 // pred_region
      %68 = vsyncadd [#allocation4], 0
      %s70 = sshll.u32 [#allocation5], 4
      %s71 = int_to_ptr.vmem [resolvable:$true] %s70
      %s72 = sshll.u32 %s1, 4
      %s73 = int_to_ptr.hbm [resolvable:$true] %s72
      %75 = dma.vmem_to_hbm [thread:$0]  %s71, 128, %s73, [#allocation4]
    $region13: #{tpu_custom_call.1} parent=1 // pred_fallthru
      _
    // Predicated region
    $region14: #{tpu_custom_call.1} parent=1 // pred_check
      _
    $region15: #{tpu_custom_call.1} parent=1 // pred_check_branch
      %77 = sbr.rel (0) target = $region17
    $region16: #{tpu_custom_call.1} parent=1 // pred_region
      %79 = dma.done [#allocation4], 128
    $region17: #{tpu_custom_call.1} parent=1 // pred_fallthru
      _
    %80 = vsyncpa [#allocation3], 1
    %81 = vsyncpa [#allocation4], 1

// kernel: tpu_custom_call.1
$region0: #{tpu_custom_call.1}
  #allocation0 [shape = 'u32[]', space=smem, size = 0x4, offset = 0x4, fixed_abs, tag = 'smem constant byte address 0x4 - core index']
  #allocation1 [shape = 'u32[72,128]{1,0:T(1,128)}', space=vmem, size = 0x9000, scoped, tag = 'internal scratch']
  #allocation2 [shape = 'f32[24,96]{1,0:T(8,128)}', space=vmem, size = 0x3000, scoped, tag = 'scratch operand']
  %s0 = inlined_call_operand.vmem [shape: f32[2,24,32], index: 0, kind: input, shape index: {}]
  %s1 = inlined_call_operand.hbm [shape: f32[1,32], index: 1, kind: input, shape index: {}]
  %s2 = inlined_call_operand.vmem [shape: f32[1,32], index: 2, kind: input, shape index: {}]
  %s3 = inlined_call_operand.hbm [shape: bf16[32,96], index: 3, kind: input, shape index: {}]
  %s4 = inlined_call_operand.vmem [shape: f32[1,96], index: 4, kind: input, shape index: {}]
  %s5 = inlined_call_operand.vmem [shape: f32[32,32], index: 5, kind: input, shape index: {}]
  %s6 = inlined_call_operand.vmem [shape: f32[1,32], index: 6, kind: input, shape index: {}]
  %s7 = inlined_call_operand.vmem [shape: f32[1,32], index: 7, kind: input, shape index: {}]
  %s8 = inlined_call_operand.vmem [shape: f32[1,32], index: 8, kind: input, shape index: {}]
  %s9 = inlined_call_operand.hbm [shape: bf16[32,128], index: 9, kind: input, shape index: {}]
  %s10 = inlined_call_operand.vmem [shape: f32[1,128], index: 10, kind: input, shape index: {}]
  %s11 = inlined_call_operand.vmem [shape: bf16[128,32], index: 11, kind: input, shape index: {}]
  %s12 = inlined_call_operand.vmem [shape: f32[1,32], index: 12, kind: input, shape index: {}]
  %s13 = inlined_call_operand.hbm [shape: f32[2,24,32], index: 13, kind: output, shape index: {}]
  %s14 = sld [smem:[#allocation0]]
  $region101: #{tpu_custom_call.1} parent=0
    _
  %s16 = ssub.s32 1, %s14
  %s17 = scalar_select 0, %s16, %s14
  $region1: #{tpu_custom_call.1} parent=0
    #allocation3 [shape = 'u8[512]{0}', space=vmem, size = 0x400, scoped, tag = 'input window, operand 1, single buffered']
    #allocation4 [shape = 's32[2]{0}', space=sflag, size = 0x8, scoped, tag = 'scoped memory for tpu_custom_call.1']
    #allocation5 [shape = 's32[2]{0}', space=sflag, size = 0x8, scoped, tag = 'scoped memory for tpu_custom_call.1']
    #allocation6 [shape = 'u8[8192]{0}', space=vmem, size = 0x2000, scoped, tag = 'input window, operand 3, single buffered']
    #allocation7 [shape = 's32[1]{0}', space=sflag, size = 0x4, scoped, tag = 'scoped memory for tpu_custom_call.1']
    #allocation8 [shape = 'u8[8192]{0}', space=vmem, size = 0x2000, scoped, tag = 'input window, operand 9, single buffered']
    #allocation9 [shape = 'u8[8192]{0}', space=vmem, size = 0x2000, scoped, tag = 'output window, operand 0']
    %18 = vsyncpa [#allocation4], 0
    %19 = vsyncpa [#allocation7], 0
    %20 = vsyncpa [#allocation5], 0
    %s21 = scalar_lea.sflag [#allocation5], 1
    %22 = vsyncpa %s21, 0
    loop: start=0, step=1, limit=8
    $region2: #{tpu_custom_call.1} parent=1 // loop_pre_header
      _
    $region3: #{tpu_custom_call.1} parent=1 // loop_header
      %s24 = sphi 0, %s28
      %p25 = scmp.ge.s32.totalorder %s24, 8
      %s31 = sphi 0, %s43
      %s32 = sphi 0, %s39
      %s33 = sphi 0, %s31
      %s34 = sphi 0, %s32
      %s35 = sphi 0, %s33
      %s36 = sphi 0, %s34
      %s46 = sphi 0, %s48
      %s49 = sphi 0, %s46
      %s50 = sphi 0, %s49
      %s66 = sphi 0, %s50
      %s70 = sphi 0, %s70
      %s72 = sphi 0, %s70
      %s73 = sphi 0, %s72
      %s87 = sphi 0, %s73
      %s91 = sphi 0, %s91
      %s93 = sphi 0, %s91
      %s94 = sphi 0, %s93
      %s108 = sphi 0, %s94
      %s112 = sphi 0, %s112
      %s114 = sphi 0, %s112
      %s115 = sphi 0, %s114
      %s129 = sphi 0, %s115
      %s133 = sphi 0, %s133
      %s135 = sphi 0, %s133
      %s136 = sphi 0, %s135
      %s150 = sphi 0, %s136
      %s154 = sphi 0, %s154
      %s156 = sphi 0, %s154
      %s157 = sphi 0, %s156
      %s171 = sphi 0, %s157
      %s175 = sphi 0, %s175
      %s177 = sphi 0, %s175
      %s178 = sphi 0, %s177
      %s192 = sphi 0, %s178
      %s196 = sphi 0, %s196
      %s198 = sphi 0, %s196
      %s199 = sphi 0, %s198
      %s213 = sphi 0, %s199
      %s217 = sphi 0, %s217
      %s219 = sphi 0, %s217
      %s220 = sphi 0, %s219
      %s234 = sphi 0, %s220
      %s238 = sphi 0, %s238
      %s240 = sphi 0, %s238
      %s241 = sphi 0, %s240
      %s255 = sphi 0, %s241
      %s259 = sphi 0, %s259
      %s261 = sphi 0, %s259
      %s262 = sphi 0, %s261
      %s276 = sphi 0, %s262
      %s280 = sphi 0, %s280
      %s282 = sphi 0, %s280
      %s283 = sphi 0, %s282
      %s297 = sphi 0, %s283
      %s301 = sphi 0, %s301
      %s303 = sphi 0, %s301
      %s304 = sphi 0, %s303
      %s318 = sphi 0, %s304
      %s326 = sphi 0, %s328
      %s329 = sphi 0, %s326
      %s330 = sphi 0, %s329
      %s346 = sphi 0, %s330
    $region4: #{tpu_custom_call.1} parent=1 // loop_header_branch
      %27 = sbr.rel (%p25) target = $region8
    $region5: #{tpu_custom_call.1} parent=1 // loop_body
      %s29 = ssub.s32 %s24, 1
      %s30 = ssub.s32 %s24, 2
      %s37 = sadd.s32 1, %s32
      %p38 = scmp.ge.s32.totalorder %s37, 3
      %s39 = scalar_select %p38, 0, %s37
      %s40 = sadd.s32 1, %s31
      %s41 = scalar_select %p38, %s40, %s31
      %p42 = scmp.ge.s32.totalorder %s41, 2
      %s43 = scalar_select %p42, 0, %s41
      %s44 = ssub.s32 %s31, %s43
      %p45 = scmp.eq.s32.totalorder %s44, 0
      %s47 = sadd.s32 %s46, 1
      %s48 = scalar_select %p45, %s46, %s47
      %p51 = pneg %p45
      %p52 = scmp.eq.s32.totalorder %s24, 5
      %p53 = por %p51, %p52
      %p54 = scmp.ne.s32.totalorder %s46, %s49
      %p55 = scmp.eq.s32.totalorder %s24, 0
      %p56 = por %p54, %p55
      %p57 = scmp.ne.s32.totalorder %s46, %s49
      %p58 = scmp.eq.s32.totalorder %s29, 5
      %p59 = por %p57, %p58
      %p60 = scmp.ne.s32.totalorder %s49, %s50
      %p61 = scmp.eq.s32.totalorder %s29, 0
      %p62 = por %p60, %p61
      %p63 = scmp.ne.s32.totalorder %s49, %s50
      %p64 = scmp.eq.s32.totalorder %s30, 5
      %p65 = por %p63, %p64
      %p67 = scmp.ne.s32.totalorder %s50, %s66
      %p68 = scmp.eq.s32.totalorder %s30, 0
      %p69 = por %p67, %p68
      %s71 = sadd.s32 %s70, 1
      %p74 = scmp.eq.s32.totalorder %s24, 5
      %p75 = scmp.ne.s32.totalorder %s70, %s72
      %p76 = scmp.eq.s32.totalorder %s24, 0
      %p77 = por %p75, %p76
      %p78 = scmp.ne.s32.totalorder %s70, %s72
      %p79 = scmp.eq.s32.totalorder %s29, 5
      %p80 = por %p78, %p79
      %p81 = scmp.ne.s32.totalorder %s72, %s73
      %p82 = scmp.eq.s32.totalorder %s29, 0
      %p83 = por %p81, %p82
      %p84 = scmp.ne.s32.totalorder %s72, %s73
      %p85 = scmp.eq.s32.totalorder %s30, 5
      %p86 = por %p84, %p85
      %p88 = scmp.ne.s32.totalorder %s73, %s87
      %p89 = scmp.eq.s32.totalorder %s30, 0
      %p90 = por %p88, %p89
      %s92 = sadd.s32 %s91, 1
      %p95 = scmp.eq.s32.totalorder %s24, 5
      %p96 = scmp.ne.s32.totalorder %s91, %s93
      %p97 = scmp.eq.s32.totalorder %s24, 0
      %p98 = por %p96, %p97
      %p99 = scmp.ne.s32.totalorder %s91, %s93
      %p100 = scmp.eq.s32.totalorder %s29, 5
      %p101 = por %p99, %p100
      %p102 = scmp.ne.s32.totalorder %s93, %s94
      %p103 = scmp.eq.s32.totalorder %s29, 0
      %p104 = por %p102, %p103
      %p105 = scmp.ne.s32.totalorder %s93, %s94
      %p106 = scmp.eq.s32.totalorder %s30, 5
      %p107 = por %p105, %p106
      %p109 = scmp.ne.s32.totalorder %s94, %s108
      %p110 = scmp.eq.s32.totalorder %s30, 0
      %p111 = por %p109, %p110
      %s113 = sadd.s32 %s112, 1
      %p116 = scmp.eq.s32.totalorder %s24, 5
      %p117 = scmp.ne.s32.totalorder %s112, %s114
      %p118 = scmp.eq.s32.totalorder %s24, 0
      %p119 = por %p117, %p118
      %p120 = scmp.ne.s32.totalorder %s112, %s114
      %p121 = scmp.eq.s32.totalorder %s29, 5
      %p122 = por %p120, %p121
      %p123 = scmp.ne.s32.totalorder %s114, %s115
      %p124 = scmp.eq.s32.totalorder %s29, 0
      %p125 = por %p123, %p124
      %p126 = scmp.ne.s32.totalorder %s114, %s115
      %p127 = scmp.eq.s32.totalorder %s30, 5
      %p128 = por %p126, %p127
      %p130 = scmp.ne.s32.totalorder %s115, %s129
      %p131 = scmp.eq.s32.totalorder %s30, 0
      %p132 = por %p130, %p131
      %s134 = sadd.s32 %s133, 1
      %p137 = scmp.eq.s32.totalorder %s24, 5
      %p138 = scmp.ne.s32.totalorder %s133, %s135
      %p139 = scmp.eq.s32.totalorder %s24, 0
      %p140 = por %p138, %p139
      %p141 = scmp.ne.s32.totalorder %s133, %s135
      %p142 = scmp.eq.s32.totalorder %s29, 5
      %p143 = por %p141, %p142
      %p144 = scmp.ne.s32.totalorder %s135, %s136
      %p145 = scmp.eq.s32.totalorder %s29, 0
      %p146 = por %p144, %p145
      %p147 = scmp.ne.s32.totalorder %s135, %s136
      %p148 = scmp.eq.s32.totalorder %s30, 5
      %p149 = por %p147, %p148
      %p151 = scmp.ne.s32.totalorder %s136, %s150
      %p152 = scmp.eq.s32.totalorder %s30, 0
      %p153 = por %p151, %p152
      %s155 = sadd.s32 %s154, 1
      %p158 = scmp.eq.s32.totalorder %s24, 5
      %p159 = scmp.ne.s32.totalorder %s154, %s156
      %p160 = scmp.eq.s32.totalorder %s24, 0
      %p161 = por %p159, %p160
      %p162 = scmp.ne.s32.totalorder %s154, %s156
      %p163 = scmp.eq.s32.totalorder %s29, 5
      %p164 = por %p162, %p163
      %p165 = scmp.ne.s32.totalorder %s156, %s157
      %p166 = scmp.eq.s32.totalorder %s29, 0
      %p167 = por %p165, %p166
      %p168 = scmp.ne.s32.totalorder %s156, %s157
      %p169 = scmp.eq.s32.totalorder %s30, 5
      %p170 = por %p168, %p169
      %p172 = scmp.ne.s32.totalorder %s157, %s171
      %p173 = scmp.eq.s32.totalorder %s30, 0
      %p174 = por %p172, %p173
      %s176 = sadd.s32 %s175, 1
      %p179 = scmp.eq.s32.totalorder %s24, 5
      %p180 = scmp.ne.s32.totalorder %s175, %s177
      %p181 = scmp.eq.s32.totalorder %s24, 0
      %p182 = por %p180, %p181
      %p183 = scmp.ne.s32.totalorder %s175, %s177
      %p184 = scmp.eq.s32.totalorder %s29, 5
      %p185 = por %p183, %p184
      %p186 = scmp.ne.s32.totalorder %s177, %s178
      %p187 = scmp.eq.s32.totalorder %s29, 0
      %p188 = por %p186, %p187
      %p189 = scmp.ne.s32.totalorder %s177, %s178
      %p190 = scmp.eq.s32.totalorder %s30, 5
      %p191 = por %p189, %p190
      %p193 = scmp.ne.s32.totalorder %s178, %s192
      %p194 = scmp.eq.s32.totalorder %s30, 0
      %p195 = por %p193, %p194
      %s197 = sadd.s32 %s196, 1
      %p200 = scmp.eq.s32.totalorder %s24, 5
      %p201 = scmp.ne.s32.totalorder %s196, %s198
      %p202 = scmp.eq.s32.totalorder %s24, 0
      %p203 = por %p201, %p202
      %p204 = scmp.ne.s32.totalorder %s196, %s198
      %p205 = scmp.eq.s32.totalorder %s29, 5
      %p206 = por %p204, %p205
      %p207 = scmp.ne.s32.totalorder %s198, %s199
      %p208 = scmp.eq.s32.totalorder %s29, 0
      %p209 = por %p207, %p208
      %p210 = scmp.ne.s32.totalorder %s198, %s199
      %p211 = scmp.eq.s32.totalorder %s30, 5
      %p212 = por %p210, %p211
      %p214 = scmp.ne.s32.totalorder %s199, %s213
      %p215 = scmp.eq.s32.totalorder %s30, 0
      %p216 = por %p214, %p215
      %s218 = sadd.s32 %s217, 1
      %p221 = scmp.eq.s32.totalorder %s24, 5
      %p222 = scmp.ne.s32.totalorder %s217, %s219
      %p223 = scmp.eq.s32.totalorder %s24, 0
      %p224 = por %p222, %p223
      %p225 = scmp.ne.s32.totalorder %s217, %s219
      %p226 = scmp.eq.s32.totalorder %s29, 5
      %p227 = por %p225, %p226
      %p228 = scmp.ne.s32.totalorder %s219, %s220
      %p229 = scmp.eq.s32.totalorder %s29, 0
      %p230 = por %p228, %p229
      %p231 = scmp.ne.s32.totalorder %s219, %s220
      %p232 = scmp.eq.s32.totalorder %s30, 5
      %p233 = por %p231, %p232
      %p235 = scmp.ne.s32.totalorder %s220, %s234
      %p236 = scmp.eq.s32.totalorder %s30, 0
      %p237 = por %p235, %p236
      %s239 = sadd.s32 %s238, 1
      %p242 = scmp.eq.s32.totalorder %s24, 5
      %p243 = scmp.ne.s32.totalorder %s238, %s240
      %p244 = scmp.eq.s32.totalorder %s24, 0
      %p245 = por %p243, %p244
      %p246 = scmp.ne.s32.totalorder %s238, %s240
      %p247 = scmp.eq.s32.totalorder %s29, 5
      %p248 = por %p246, %p247
      %p249 = scmp.ne.s32.totalorder %s240, %s241
      %p250 = scmp.eq.s32.totalorder %s29, 0
      %p251 = por %p249, %p250
      %p252 = scmp.ne.s32.totalorder %s240, %s241
      %p253 = scmp.eq.s32.totalorder %s30, 5
      %p254 = por %p252, %p253
      %p256 = scmp.ne.s32.totalorder %s241, %s255
      %p257 = scmp.eq.s32.totalorder %s30, 0
      %p258 = por %p256, %p257
      %s260 = sadd.s32 %s259, 1
      %p263 = scmp.eq.s32.totalorder %s24, 5
      %p264 = scmp.ne.s32.totalorder %s259, %s261
      %p265 = scmp.eq.s32.totalorder %s24, 0
      %p266 = por %p264, %p265
      %p267 = scmp.ne.s32.totalorder %s259, %s261
      %p268 = scmp.eq.s32.totalorder %s29, 5
      %p269 = por %p267, %p268
      %p270 = scmp.ne.s32.totalorder %s261, %s262
      %p271 = scmp.eq.s32.totalorder %s29, 0
      %p272 = por %p270, %p271
      %p273 = scmp.ne.s32.totalorder %s261, %s262
      %p274 = scmp.eq.s32.totalorder %s30, 5
      %p275 = por %p273, %p274
      %p277 = scmp.ne.s32.totalorder %s262, %s276
      %p278 = scmp.eq.s32.totalorder %s30, 0
      %p279 = por %p277, %p278
      %s281 = sadd.s32 %s280, 1
      %p284 = scmp.eq.s32.totalorder %s24, 5
      %p285 = scmp.ne.s32.totalorder %s280, %s282
      %p286 = scmp.eq.s32.totalorder %s24, 0
      %p287 = por %p285, %p286
      %p288 = scmp.ne.s32.totalorder %s280, %s282
      %p289 = scmp.eq.s32.totalorder %s29, 5
      %p290 = por %p288, %p289
      %p291 = scmp.ne.s32.totalorder %s282, %s283
      %p292 = scmp.eq.s32.totalorder %s29, 0
      %p293 = por %p291, %p292
      %p294 = scmp.ne.s32.totalorder %s282, %s283
      %p295 = scmp.eq.s32.totalorder %s30, 5
      %p296 = por %p294, %p295
      %p298 = scmp.ne.s32.totalorder %s283, %s297
      %p299 = scmp.eq.s32.totalorder %s30, 0
      %p300 = por %p298, %p299
      %s302 = sadd.s32 %s301, 1
      %p305 = scmp.eq.s32.totalorder %s24, 5
      %p306 = scmp.ne.s32.totalorder %s301, %s303
      %p307 = scmp.eq.s32.totalorder %s24, 0
      %p308 = por %p306, %p307
      %p309 = scmp.ne.s32.totalorder %s301, %s303
      %p310 = scmp.eq.s32.totalorder %s29, 5
      %p311 = por %p309, %p310
      %p312 = scmp.ne.s32.totalorder %s303, %s304
      %p313 = scmp.eq.s32.totalorder %s29, 0
      %p314 = por %p312, %p313
      %p315 = scmp.ne.s32.totalorder %s303, %s304
      %p316 = scmp.eq.s32.totalorder %s30, 5
      %p317 = por %p315, %p316
      %p319 = scmp.ne.s32.totalorder %s304, %s318
      %p320 = scmp.eq.s32.totalorder %s30, 0
      %p321 = por %p319, %p320
      %s322 = ssub.s32 %s31, %s43
      %s323 = ssub.s32 %s32, %s39
      %s324 = sor.u32 %s322, %s323
      %p325 = scmp.eq.s32.totalorder %s324, 0
      %s327 = sadd.s32 %s326, 1
      %s328 = scalar_select %p325, %s326, %s327
      %p331 = pneg %p325
      %p332 = scmp.eq.s32.totalorder %s24, 5
      %p333 = por %p331, %p332
      %p334 = scmp.ne.s32.totalorder %s326, %s329
      %p335 = scmp.eq.s32.totalorder %s24, 0
      %p336 = por %p334, %p335
      %p337 = scmp.ne.s32.totalorder %s326, %s329
      %p338 = scmp.eq.s32.totalorder %s29, 5
      %p339 = por %p337, %p338
      %p340 = scmp.ne.s32.totalorder %s329, %s330
      %p341 = scmp.eq.s32.totalorder %s29, 0
      %p342 = por %p340, %p341
      %p343 = scmp.ne.s32.totalorder %s329, %s330
      %p344 = scmp.eq.s32.totalorder %s30, 5
      %p345 = por %p343, %p344
      %p347 = scmp.ne.s32.totalorder %s330, %s346
      %p348 = scmp.eq.s32.totalorder %s30, 0
      %p349 = por %p347, %p348
      %p350 = scmp.le.s32.totalorder 1, %s24
      %p351 = scmp.lt.s32.totalorder %s24, 7
      %p352 = pnand %p350, %p351
      %p353 = pneg %p352
      // Predicated region
      $region9: #{tpu_custom_call.1} parent=5 // pred_check
        _
      $region10: #{tpu_custom_call.1} parent=5 // pred_check_branch
        %355 = sbr.rel (%p352) target = $region12
      $region11: #{tpu_custom_call.1} parent=5 // pred_region
        %s356 = ssub.s32 %s24, 1
        // Predicated region
        $region13: #{tpu_custom_call.1} parent=11 // pred_check
          %p357 = pneg %p83
        $region14: #{tpu_custom_call.1} parent=11 // pred_check_branch
          %359 = sbr.rel (%p357) target = $region16
        $region15: #{tpu_custom_call.1} parent=11 // pred_region
          %361 = vsyncadd [#allocation4], 0
          %s363 = sshll.u32 %s1, 4
          %s364 = int_to_ptr.hbm [resolvable:$true] %s363
          %s365 = sshll.u32 [#allocation3], 4
          %s366 = int_to_ptr.vmem [resolvable:$true] %s365
          %368 = dma.hbm_to_vmem [thread:$0]  %s364, 16, %s366, [#allocation4]
        $region16: #{tpu_custom_call.1} parent=11 // pred_fallthru
          _
        // Predicated region
        $region17: #{tpu_custom_call.1} parent=11 // pred_check
          %p369 = pneg %p104
        $region18: #{tpu_custom_call.1} parent=11 // pred_check_branch
          %371 = sbr.rel (%p369) target = $region20
        $region19: #{tpu_custom_call.1} parent=11 // pred_region
          _
        $region20: #{tpu_custom_call.1} parent=11 // pred_fallthru
          _
        // Predicated region
        $region21: #{tpu_custom_call.1} parent=11 // pred_check
          %p372 = pneg %p125
        $region22: #{tpu_custom_call.1} parent=11 // pred_check_branch
          %374 = sbr.rel (%p372) target = $region24
        $region23: #{tpu_custom_call.1} parent=11 // pred_region
          %376 = vsyncadd [#allocation7], 0
          %s377 = sshll.u32 %s3, 4
          %s378 = int_to_ptr.hbm [resolvable:$true] %s377
          %s379 = sshll.u32 [#allocation6], 4
          %s380 = int_to_ptr.vmem [resolvable:$true] %s379
          %385 = dma.hbm_to_vmem [thread:$0]  %s378, 256, %s380, [#allocation7], 64, 64, 4
        $region24: #{tpu_custom_call.1} parent=11 // pred_fallthru
          _
        // Predicated region
        $region25: #{tpu_custom_call.1} parent=11 // pred_check
          %p386 = pneg %p146
        $region26: #{tpu_custom_call.1} parent=11 // pred_check_branch
          %388 = sbr.rel (%p386) target = $region28
        $region27: #{tpu_custom_call.1} parent=11 // pred_region
          _
        $region28: #{tpu_custom_call.1} parent=11 // pred_fallthru
          _
        // Predicated region
        $region29: #{tpu_custom_call.1} parent=11 // pred_check
          %p389 = pneg %p167
        $region30: #{tpu_custom_call.1} parent=11 // pred_check_branch
          %391 = sbr.rel (%p389) target = $region32
        $region31: #{tpu_custom_call.1} parent=11 // pred_region
          _
        $region32: #{tpu_custom_call.1} parent=11 // pred_fallthru
          _
        // Predicated region
        $region33: #{tpu_custom_call.1} parent=11 // pred_check
          %p392 = pneg %p188
        $region34: #{tpu_custom_call.1} parent=11 // pred_check_branch
          %394 = sbr.rel (%p392) target = $region36
        $region35: #{tpu_custom_call.1} parent=11 // pred_region
          _
        $region36: #{tpu_custom_call.1} parent=11 // pred_fallthru
          _
        // Predicated region
        $region37: #{tpu_custom_call.1} parent=11 // pred_check
          %p395 = pneg %p209
        $region38: #{tpu_custom_call.1} parent=11 // pred_check_branch
          %397 = sbr.rel (%p395) target = $region40
        $region39: #{tpu_custom_call.1} parent=11 // pred_region
          _
        $region40: #{tpu_custom_call.1} parent=11 // pred_fallthru
          _
        // Predicated region
        $region41: #{tpu_custom_call.1} parent=11 // pred_check
          %p398 = pneg %p230
        $region42: #{tpu_custom_call.1} parent=11 // pred_check_branch
          %400 = sbr.rel (%p398) target = $region44
        $region43: #{tpu_custom_call.1} parent=11 // pred_region
          _
        $region44: #{tpu_custom_call.1} parent=11 // pred_fallthru
          _
        // Predicated region
        $region45: #{tpu_custom_call.1} parent=11 // pred_check
          %p401 = pneg %p251
        $region46: #{tpu_custom_call.1} parent=11 // pred_check_branch
          %403 = sbr.rel (%p401) target = $region48
        $region47: #{tpu_custom_call.1} parent=11 // pred_region
          %405 = vsyncadd [#allocation7], 0
          %s406 = sshll.u32 %s9, 4
          %s407 = int_to_ptr.hbm [resolvable:$true] %s406
          %s408 = sshll.u32 [#allocation8], 4
          %s409 = int_to_ptr.vmem [resolvable:$true] %s408
          %414 = dma.hbm_to_vmem [thread:$0]  %s407, 256, %s409, [#allocation7], 64, 64, 4
        $region48: #{tpu_custom_call.1} parent=11 // pred_fallthru
          _
        // Predicated region
        $region49: #{tpu_custom_call.1} parent=11 // pred_check
          %p415 = pneg %p272
        $region50: #{tpu_custom_call.1} parent=11 // pred_check_branch
          %417 = sbr.rel (%p415) target = $region52
        $region51: #{tpu_custom_call.1} parent=11 // pred_region
          _
        $region52: #{tpu_custom_call.1} parent=11 // pred_fallthru
          _
        // Predicated region
        $region53: #{tpu_custom_call.1} parent=11 // pred_check
          %p418 = pneg %p293
        $region54: #{tpu_custom_call.1} parent=11 // pred_check_branch
          %420 = sbr.rel (%p418) target = $region56
        $region55: #{tpu_custom_call.1} parent=11 // pred_region
          _
        $region56: #{tpu_custom_call.1} parent=11 // pred_fallthru
          _
        // Predicated region
        $region57: #{tpu_custom_call.1} parent=11 // pred_check
          %p421 = pneg %p314
        $region58: #{tpu_custom_call.1} parent=11 // pred_check_branch
          %423 = sbr.rel (%p421) target = $region60
        $region59: #{tpu_custom_call.1} parent=11 // pred_region
          _
        $region60: #{tpu_custom_call.1} parent=11 // pred_fallthru
          _
      $region12: #{tpu_custom_call.1} parent=5 // pred_fallthru
        _
      %p424 = scmp.lt.s32.totalorder %s24, 6
      // Predicated region
      $region61: #{tpu_custom_call.1} parent=5 // pred_check
        %p425 = pneg %p424
      $region62: #{tpu_custom_call.1} parent=5 // pred_check_branch
        %427 = sbr.rel (%p425) target = $region64
      $region63: #{tpu_custom_call.1} parent=5 // pred_region
        // Predicated region
        $region65: #{tpu_custom_call.1} parent=63 // pred_check
          %p428 = pneg %p56
        $region66: #{tpu_custom_call.1} parent=63 // pred_check_branch
          %430 = sbr.rel (%p428) target = $region68
        $region67: #{tpu_custom_call.1} parent=63 // pred_region
          %p431 = scmp.lt.s32.totalorder %s31, 1
          %s432 = scalar_select %p431, %s31, 1
          %s433 = smul.addr %s432, 3
          %s434 = smul.addr %s433, 8
          %s435 = scalar_lea.vmem %s0, %s434
        $region68: #{tpu_custom_call.1} parent=63 // pred_fallthru
          _
      $region64: #{tpu_custom_call.1} parent=5 // pred_fallthru
        _
      %p436 = scmp.le.s32.totalorder 1, %s24
      %p437 = scmp.lt.s32.totalorder %s24, 7
      %p438 = pnand %p436, %p437
      %p439 = pneg %p438
      // Predicated region
      $region69: #{tpu_custom_call.1} parent=5 // pred_check
        _
      $region70: #{tpu_custom_call.1} parent=5 // pred_check_branch
        %441 = sbr.rel (%p438) target = $region72
      $region71: #{tpu_custom_call.1} parent=5 // pred_region
        %s442 = ssub.s32 %s24, 1
        // Predicated region
        $region73: #{tpu_custom_call.1} parent=71 // pred_check
          %p443 = pneg %p83
        $region74: #{tpu_custom_call.1} parent=71 // pred_check_branch
          %445 = sbr.rel (%p443) target = $region76
        $region75: #{tpu_custom_call.1} parent=71 // pred_region
          %447 = dma.done [#allocation4], 16
        $region76: #{tpu_custom_call.1} parent=71 // pred_fallthru
          _
        // Predicated region
        $region77: #{tpu_custom_call.1} parent=71 // pred_check
          %p448 = pneg %p125
        $region78: #{tpu_custom_call.1} parent=71 // pred_check_branch
          %450 = sbr.rel (%p448) target = $region80
        $region79: #{tpu_custom_call.1} parent=71 // pred_region
          %452 = dma.done [#allocation7], 256
        $region80: #{tpu_custom_call.1} parent=71 // pred_fallthru
          _
        // Predicated region
        $region81: #{tpu_custom_call.1} parent=71 // pred_check
          %p453 = pneg %p251
        $region82: #{tpu_custom_call.1} parent=71 // pred_check_branch
          %455 = sbr.rel (%p453) target = $region84
        $region83: #{tpu_custom_call.1} parent=71 // pred_region
          %457 = dma.done [#allocation7], 256
        $region84: #{tpu_custom_call.1} parent=71 // pred_fallthru
          _
        %p458 = scmp.lt.s32.totalorder %s33, 1
        %s459 = scalar_select %p458, %s33, 1
        %s460 = smul.addr %s459, 3
        %s461 = smul.addr %s460, 8
        %s462 = scalar_lea.vmem %s0, %s461
        %p463 = pneg %p62
        %p464 = pneg %p59
        %p465 = pneg %p83
        %p466 = pneg %p80
        %p467 = pneg %p104
        %p468 = pneg %p101
        %p469 = pneg %p125
        %p470 = pneg %p122
        %p471 = pneg %p146
        %p472 = pneg %p143
        %p473 = pneg %p167
        %p474 = pneg %p164
        %p475 = pneg %p188
        %p476 = pneg %p185
        %p477 = pneg %p209
        %p478 = pneg %p206
        %p479 = pneg %p230
        %p480 = pneg %p227
        %p481 = pneg %p251
        %p482 = pneg %p248
        %p483 = pneg %p272
        %p484 = pneg %p269
        %p485 = pneg %p293
        %p486 = pneg %p290
        %p487 = pneg %p314
        %p488 = pneg %p311
        %p489 = pneg %p342
        %p490 = pneg %p339
        %s491 = sand.u32 %s329, 1
        %s492 = scalar_lea.sflag [#allocation5], %s491
        %s493 = sand.u32 %s329, 1
        %s494 = smul.addr %s493, 8
        %s495 = scalar_lea.vmem [#allocation9], %s494
        %p496 = scmp.lt.s32.totalorder %s33, 1
        %s497 = scalar_select %p496, %s33, 1
        %s498 = smul.addr %s497, 3
        %s499 = smul.addr %s498, 8
        %s500 = scalar_lea.vmem %s0, %s499
        %p502 = scmp.eq.s32.totalorder %s34, 0
        // Predicated region
        $region85: #{tpu_custom_call.1} parent=71 // pred_check
          %p503 = pneg %p502
        $region86: #{tpu_custom_call.1} parent=71 // pred_check_branch
          %505 = sbr.rel (%p503) target = $region88
        $region87: #{tpu_custom_call.1} parent=71 // pred_region
          %v506 = vld [vmem:[%s500] sm:$0xff]
          %v507 = vld [vmem:[%s500 + $0x8] sm:$0xff]
          %v508 = vld [vmem:[%s500 + $0x10] sm:$0xff]
          %v509 = vld [vmem:[#allocation3] sm:$0x1]
          %v510 = vld [vmem:[%s2] sm:$0x1]
          %vm511 = vcmask 261120
          %v512 = vsel %vm511, %v506, 0.0
          %513 = vadd.xlane.f32.xlu0 %v512
          %v514 = vpop.xlane.xlu0 %513
          %v515 = vsel %vm511, %v507, 0.0
          %516 = vadd.xlane.f32.xlu0 %v515
          %v517 = vpop.xlane.xlu0 %516
          %v518 = vsel %vm511, %v508, 0.0
          %519 = vadd.xlane.f32.xlu0 %v518
          %v520 = vpop.xlane.xlu0 %519
          %v521 = vrcp.pop 32.0
          %v522 = vmul.f32 32.0, %v521
          %v523 = vsub.f32 1.0, %v522
          %v524 = vmul.f32 %v521, %v523
          %v525 = vadd.f32 %v521, %v524
          %vm526 = vweird.f32 %v521
          %v527 = vsel %vm526, %v521, %v525
          %v528 = vmul.f32 %v514, %v527
          %v529 = vmul.f32 %v517, %v527
          %v530 = vmul.f32 %v520, %v527
          %v531 = vsub.f32 %v506, %v528
          %v532 = vsub.f32 %v507, %v529
          %v533 = vsub.f32 %v508, %v530
          %v534 = vmul.f32 %v531, %v531
          %v535 = vmul.f32 %v532, %v532
          %v536 = vmul.f32 %v533, %v533
          %v537 = vsel %vm511, %v534, 0.0
          %538 = vadd.xlane.f32.xlu0 %v537
          %v539 = vpop.xlane.xlu0 %538
          %v540 = vsel %vm511, %v535, 0.0
          %541 = vadd.xlane.f32.xlu0 %v540
          %v542 = vpop.xlane.xlu0 %541
          %v543 = vsel %vm511, %v536, 0.0
          %544 = vadd.xlane.f32.xlu0 %v543
          %v545 = vpop.xlane.xlu0 %544
          %v546 = vmul.f32 %v539, %v527
          %v547 = vmul.f32 %v542, %v527
          %v548 = vmul.f32 %v545, %v527
          %v549 = vadd.f32 %v546, 1e-05
          %v550 = vadd.f32 %v547, 1e-05
          %v551 = vadd.f32 %v548, 1e-05
          %v552 = vrsqrt.pop %v549
          %v553 = vmul.f32 %v552, %v549
          %v554 = vmul.f32 %v553, %v552
          %v555 = vmul.f32 0.5, %v554
          %v556 = vsub.f32 1.5, %v555
          %v557 = vmul.f32 %v552, %v556
          %vm558 = vweird.f32 %v549
          %vm559 = vweird.f32 %v552
          %vm560 = vmor %vm558, %vm559
          %v561 = vsel %vm560, %v552, %v557
          %v562 = vrsqrt.pop %v550
          %v563 = vmul.f32 %v562, %v550
          %v564 = vmul.f32 %v563, %v562
          %v565 = vmul.f32 0.5, %v564
          %v566 = vsub.f32 1.5, %v565
          %v567 = vmul.f32 %v562, %v566
          %vm568 = vweird.f32 %v550
          %vm569 = vweird.f32 %v562
          %vm570 = vmor %vm568, %vm569
          %v571 = vsel %vm570, %v562, %v567
          %v572 = vrsqrt.pop %v551
          %v573 = vmul.f32 %v572, %v551
          %v574 = vmul.f32 %v573, %v572
          %v575 = vmul.f32 0.5, %v574
          %v576 = vsub.f32 1.5, %v575
          %v577 = vmul.f32 %v572, %v576
          %vm578 = vweird.f32 %v551
          %vm579 = vweird.f32 %v572
          %vm580 = vmor %vm578, %vm579
          %v581 = vsel %vm580, %v572, %v577
          %v582 = vmul.f32 %v531, %v561
          %v583 = vmul.f32 %v532, %v571
          %v584 = vmul.f32 %v533, %v581
          %v586 = vperm.slane %v509, 0
          %v588 = vmul.f32 %v582, %v586
          %v589 = vmul.f32 %v583, %v586
          %v590 = vmul.f32 %v584, %v586
          %v592 = vperm.slane %v510, 0
          %v594 = vadd.f32 %v588, %v592
          %v595 = vadd.f32 %v589, %v592
          %v596 = vadd.f32 %v590, %v592
          %v597 = vpack.c.bf16 %v595, %v594
          %v598 = vpack.c.bf16 %v596, %v596
          %v599 = vld [vmem:[#allocation6] sm:$0xf]
          %v600 = vld [vmem:[#allocation6 + $0x4] sm:$0xf]
          %v601 = vld [vmem:[#allocation6 + $0x8] sm:$0xf]
          %v602 = vld [vmem:[#allocation6 + $0xc] sm:$0xf]
          %v603 = vld [vmem:[%s4] sm:$0x1]
          %v605 = vperm.slane %v603, 0
          %v611 = vunpack.c.l.b16 %v599
          %v612 = vunpack.c.l.b16 %v600
          %v613 = vunpack.c.l.b16 %v601
          %v614 = vunpack.c.l.b16 %v602
          %v615 = vpack.c.b16 %v612, %v611
          %v616 = vpack.c.b16 %v614, %v613
          %v620 = vsel %vm511, %v597, 0
          %v623 = vsel %vm511, %v598, 0
          %625 = vmatpush.bf16.msra.mxu0 0
          %626 = vmatpush.bf16.msra.mxu0 0
          %627 = vmatpush.bf16.msra.mxu0 0
          %628 = vmatpush.bf16.msra.mxu0 0
          %629 = vmatpush.bf16.msra.mxu0 0
          %630 = vmatpush.bf16.msra.mxu0 0
          %631 = vmatpush.bf16.msra.mxu0 %v616
          %632 = vmatpush.bf16.msra.mxu0 %v615
          %633 = vmatmul.bf16.gmra.mxu0 %v620
          %v634 = vpop.f32.mrf.mxu0
          %v635 = vadd.f32 %v605, %v634
          %v636 = vpop.f32.mrf.mxu0
          %v637 = vadd.f32 %v605, %v636
          %638 = vmatmul.bf16.gmra.mxu0 %v623
          %v639 = vpop.f32.mrf.mxu0
          %v640 = vadd.f32 %v605, %v639
          %v641 = vpop.f32.mrf.mxu0
          %642 = vdwg.mxu0
          %v643 = vlaneseq
          %v644 = vand.u32 %v643, 127
          %vm645 = vcmp.lt.s32.totalorder %v644, 32
          %v646 = vsel %vm645, 0.35355338, 1.0
          %v647 = vmul.f32 %v635, %v646
          %v648 = vmul.f32 %v637, %v646
          %v649 = vmul.f32 %v640, %v646
          %vm650 = vcmask 785408
          %651 = vst.msk [vmem:[#allocation2] sm:$0xff] %vm650, %v647
          %652 = vst.msk [vmem:[#allocation2 + $0x8] sm:$0xff] %vm650, %v648
          %653 = vst.msk [vmem:[#allocation2 + $0x10] sm:$0xff] %vm650, %v649
        $region88: #{tpu_custom_call.1} parent=71 // pred_fallthru
          _
        %s654 = smul.u32 %s34, 8
        %s655 = scalar_lea.vmem %s500, %s654
        %v656 = vld [vmem:[%s655] sm:$0xff]
        %s657 = scalar_lea.vmem [#allocation2], %s654
        %v658 = vld [vmem:[%s657] sm:$0xff]
        %v659 = vld [vmem:[#allocation2] sm:$0xff]
        %v660 = vld [vmem:[#allocation2 + $0x8] sm:$0xff]
        %v661 = vld [vmem:[#allocation2 + $0x10] sm:$0xff]
        %v662 = vlaneseq
        %v663 = vshrl.u32 %v662, 7
        %v664 = vstv %s654
        %v665 = vadd.s32 %v664, %v663
        %v666 = vlaneseq
        %v667 = vand.u32 %v666, 127
        %vm668 = vcmp.lt.s32.totalorder %v667, 0
        %v669 = vsub.s32 0, %v667
        %v670 = vsel %vm668, %v669, %v667
        %v671 = vshrl.u32 %v670, 3
        %v672 = vand.u32 %v670, 7
        %v673 = vsub.s32 0, %v672
        %v674 = vsel %vm668, %v673, %v672
        %vm675 = vcmp.ne.s32.totalorder %v674, 0
        %vm676 = vcmp.lt.s32.totalorder %v674, 0
        %vm677 = vmand %vm676, %vm675
        %v678 = vadd.s32 %v674, 8
        %v679 = vsel %vm677, %v678, %v674
        %vm680 = vcmp.lt.s32.totalorder %v665, 0
        %v681 = vsub.s32 0, %v665
        %v682 = vsel %vm680, %v681, %v665
        %v683 = vshrl.u32 %v682, 3
        %v684 = vand.u32 %v682, 7
        %v685 = vsub.s32 0, %v684
        %v686 = vsel %vm680, %v685, %v684
        %vm687 = vcmp.ne.s32.totalorder %v686, 0
        %vm688 = vcmp.lt.s32.totalorder %v686, 0
        %vm689 = vmand %vm688, %vm687
        %v690 = vadd.s32 %v686, 8
        %v691 = vsel %vm689, %v690, %v686
        %vm692 = vcmp.le.s32.totalorder %v679, %v691
        %v693 = vsel %vm692, 0.0, -1e+30
        %v694 = vpack.c.bf16 %v658, %v658
        %v695 = vpack.c.bf16 %v660, %v659
        %v696 = vpack.c.bf16 %v661, %v661
        %699 = vrot.lane.b32.xlu0 %v695, 96
        %v700 = vpop.permute.xlu0 %699
        %701 = vrot.lane.b32.xlu0 %v696, 96
        %v702 = vpop.permute.xlu0 %701
        %vm703 = vcmask 64512
        %v705 = vsel %vm703, %v694, 0
        %v708 = vsel %vm703, %v700, 0
        %v711 = vsel %vm703, %v702, 0
        %713 = vmatpush.bf16.xpose.msra.mxu0 0
        %714 = vmatpush.bf16.xpose.msra.mxu0 0
        %715 = vmatpush.bf16.xpose.msra.mxu0 0
        %716 = vmatpush.bf16.xpose.msra.mxu0 0
        %717 = vmatpush.bf16.xpose.msra.mxu0 0
        %718 = vmatpush.bf16.xpose.msra.mxu0 0
        %719 = vmatpush.bf16.xpose.msra.mxu0 %v711
        %720 = vmatpush.bf16.xpose.msra.mxu0 %v708
        %721 = vmatmul.bf16.gmra.mxu0 %v705
        %v722 = vpop.f32.mrf.mxu0
        %v723 = vadd.f32 %v693, %v722
        %v724 = vpop.f32.mrf.mxu0
        %725 = vdwg.mxu0
        %vm726 = vcmask 195584
        %v727 = vsel %vm726, %v723, -inf
        %728 = vmax.xlane.f32.xlu0 %v727
        %v729 = vpop.xlane.xlu0 %728
        %v730 = vsub.f32 %v723, %v729
        %v731 = vmul.f32 %v730, 1.442695
        %v732 = vpow.pop %v731
        %v733 = vsel %vm726, %v732, 0.0
        %734 = vadd.xlane.f32.xlu0 %v733
        %v735 = vpop.xlane.xlu0 %734
        %v736 = vrcp.pop %v735
        %v737 = vmul.f32 %v732, %v736
        %v738 = vpack.c.bf16 %v737, %v737
        %739 = vrot.lane.b32.xlu0 %v695, 64
        %v740 = vpop.permute.xlu0 %739
        %741 = vrot.lane.b32.xlu0 %v696, 64
        %v742 = vpop.permute.xlu0 %741
        %v745 = vsel %vm726, %v738, 0
        %vm747 = vcmask 1043456
        %v749 = vsel %vm747, %v742, 0
        %751 = vmatpush.bf16.msra.mxu0 0
        %752 = vmatpush.bf16.msra.mxu0 0
        %753 = vmatpush.bf16.msra.mxu0 0
        %754 = vmatpush.bf16.msra.mxu0 0
        %755 = vmatpush.bf16.msra.mxu0 0
        %756 = vmatpush.bf16.msra.mxu0 0
        %757 = vmatpush.bf16.msra.mxu0 %v749
        %758 = vmatpush.bf16.msra.mxu0 %v740
        %759 = vmatmul.bf16.gmra.mxu0 %v745
        %v760 = vpop.f32.mrf.mxu0
        %v761 = vadd.f32 0.0, %v760
        %v762 = vpop.f32.mrf.mxu0
        %763 = vdwg.mxu0
        %v764 = vpack.c.bf16 %v761, %v761
        %v765 = vld [vmem:[%s5] sm:$0xff]
        %v766 = vpack.c.bf16 %v765, %v765
        %768 = vrot.lane.b32.xlu0 %v694, 120
        %v769 = vpop.permute.xlu0 %768
        %770 = vrot.lane.b32.xlu0 %v695, 88
        %v771 = vpop.permute.xlu0 %770
        %772 = vrot.lane.b32.xlu0 %v696, 88
        %v773 = vpop.permute.xlu0 %772
        %v775 = vsel %vm703, %v769, 0
        %v778 = vsel %vm703, %v771, 0
        %v781 = vsel %vm703, %v773, 0
        %783 = vmatpush.bf16.xpose.msra.mxu0 0
        %784 = vmatpush.bf16.xpose.msra.mxu0 0
        %785 = vmatpush.bf16.xpose.msra.mxu0 0
        %786 = vmatpush.bf16.xpose.msra.mxu0 0
        %787 = vmatpush.bf16.xpose.msra.mxu0 0
        %788 = vmatpush.bf16.xpose.msra.mxu0 0
        %789 = vmatpush.bf16.xpose.msra.mxu0 %v781
        %790 = vmatpush.bf16.xpose.msra.mxu0 %v778
        %791 = vmatmul.bf16.gmra.mxu0 %v775
        %v792 = vpop.f32.mrf.mxu0
        %v793 = vadd.f32 %v693, %v792
        %v794 = vpop.f32.mrf.mxu0
        %795 = vdwg.mxu0
        %v796 = vsel %vm726, %v793, -inf
        %797 = vmax.xlane.f32.xlu0 %v796
        %v798 = vpop.xlane.xlu0 %797
        %v799 = vsub.f32 %v793, %v798
        %v800 = vmul.f32 %v799, 1.442695
        %v801 = vpow.pop %v800
        %v802 = vsel %vm726, %v801, 0.0
        %803 = vadd.xlane.f32.xlu0 %v802
        %v804 = vpop.xlane.xlu0 %803
        %v805 = vrcp.pop %v804
        %v806 = vmul.f32 %v801, %v805
        %v807 = vpack.c.bf16 %v806, %v806
        %808 = vrot.lane.b32.xlu0 %v695, 56
        %v809 = vpop.permute.xlu0 %808
        %810 = vrot.lane.b32.xlu0 %v696, 56
        %v811 = vpop.permute.xlu0 %810
        %v814 = vsel %vm726, %v807, 0
        %v817 = vsel %vm747, %v811, 0
        %819 = vmatpush.bf16.msra.mxu0 0
        %820 = vmatpush.bf16.msra.mxu0 0
        %821 = vmatpush.bf16.msra.mxu0 0
        %822 = vmatpush.bf16.msra.mxu0 0
        %823 = vmatpush.bf16.msra.mxu0 0
        %824 = vmatpush.bf16.msra.mxu0 0
        %825 = vmatpush.bf16.msra.mxu0 %v817
        %826 = vmatpush.bf16.msra.mxu0 %v809
        %827 = vmatmul.bf16.gmra.mxu0 %v814
        %v828 = vpop.f32.mrf.mxu0
        %v829 = vadd.f32 0.0, %v828
        %v830 = vpop.f32.mrf.mxu0
        %831 = vdwg.mxu0
        %v832 = vpack.c.bf16 %v829, %v829
        %v833 = vld [vmem:[%s5 + $0x8] sm:$0xff]
        %v834 = vpack.c.bf16 %v833, %v833
        %v836 = vsel %vm703, %v832, 0
        %v839 = vsel %vm747, %v834, 0
        %841 = vmatpush.bf16.msra.mxu0 0
        %842 = vmatpush.bf16.msra.mxu0 0
        %843 = vmatpush.bf16.msra.mxu0 0
        %844 = vmatpush.bf16.msra.mxu0 0
        %845 = vmatpush.bf16.msra.mxu0 0
        %846 = vmatpush.bf16.msra.mxu0 0
        %847 = vmatpush.bf16.msra.mxu0 0
        %848 = vmatpush.bf16.msra.mxu0 %v839
        %849 = vmatmul.bf16.gmra.mxu0 %v836
        %v850 = vpop.f32.mrf.mxu0
        %v851 = vadd.f32 0.0, %v850
        %v852 = vpop.f32.mrf.mxu0
        %853 = vdwg.mxu0
        %v855 = vsel %vm703, %v764, 0
        %v858 = vsel %vm747, %v766, 0
        %860 = vmatpush.bf16.msra.mxu0 0
        %861 = vmatpush.bf16.msra.mxu0 0
        %862 = vmatpush.bf16.msra.mxu0 0
        %863 = vmatpush.bf16.msra.mxu0 0
        %864 = vmatpush.bf16.msra.mxu0 0
        %865 = vmatpush.bf16.msra.mxu0 0
        %866 = vmatpush.bf16.msra.mxu0 0
        %867 = vmatpush.bf16.msra.mxu0 %v858
        %868 = vmatmul.bf16.gmra.mxu0 %v855
        %v869 = vpop.f32.mrf.mxu0
        %v870 = vadd.f32 %v851, %v869
        %v871 = vpop.f32.mrf.mxu0
        %872 = vdwg.mxu0
        %873 = vrot.lane.b32.xlu0 %v694, 112
        %v874 = vpop.permute.xlu0 %873
        %875 = vrot.lane.b32.xlu0 %v695, 80
        %v876 = vpop.permute.xlu0 %875
        %877 = vrot.lane.b32.xlu0 %v696, 80
        %v878 = vpop.permute.xlu0 %877
        %v880 = vsel %vm703, %v874, 0
        %v883 = vsel %vm703, %v876, 0
        %v886 = vsel %vm703, %v878, 0
        %888 = vmatpush.bf16.xpose.msra.mxu0 0
        %889 = vmatpush.bf16.xpose.msra.mxu0 0
        %890 = vmatpush.bf16.xpose.msra.mxu0 0
        %891 = vmatpush.bf16.xpose.msra.mxu0 0
        %892 = vmatpush.bf16.xpose.msra.mxu0 0
        %893 = vmatpush.bf16.xpose.msra.mxu0 0
        %894 = vmatpush.bf16.xpose.msra.mxu0 %v886
        %895 = vmatpush.bf16.xpose.msra.mxu0 %v883
        %896 = vmatmul.bf16.gmra.mxu0 %v880
        %v897 = vpop.f32.mrf.mxu0
        %v898 = vadd.f32 %v693, %v897
        %v899 = vpop.f32.mrf.mxu0
        %900 = vdwg.mxu0
        %v901 = vsel %vm726, %v898, -inf
        %902 = vmax.xlane.f32.xlu0 %v901
        %v903 = vpop.xlane.xlu0 %902
        %v904 = vsub.f32 %v898, %v903
        %v905 = vmul.f32 %v904, 1.442695
        %v906 = vpow.pop %v905
        %v907 = vsel %vm726, %v906, 0.0
        %908 = vadd.xlane.f32.xlu0 %v907
        %v909 = vpop.xlane.xlu0 %908
        %v910 = vrcp.pop %v909
        %v911 = vmul.f32 %v906, %v910
        %v912 = vpack.c.bf16 %v911, %v911
        %913 = vrot.lane.b32.xlu0 %v695, 48
        %v914 = vpop.permute.xlu0 %913
        %915 = vrot.lane.b32.xlu0 %v696, 48
        %v916 = vpop.permute.xlu0 %915
        %v919 = vsel %vm726, %v912, 0
        %v922 = vsel %vm747, %v916, 0
        %924 = vmatpush.bf16.msra.mxu0 0
        %925 = vmatpush.bf16.msra.mxu0 0
        %926 = vmatpush.bf16.msra.mxu0 0
        %927 = vmatpush.bf16.msra.mxu0 0
        %928 = vmatpush.bf16.msra.mxu0 0
        %929 = vmatpush.bf16.msra.mxu0 0
        %930 = vmatpush.bf16.msra.mxu0 %v922
        %931 = vmatpush.bf16.msra.mxu0 %v914
        %932 = vmatmul.bf16.gmra.mxu0 %v919
        %v933 = vpop.f32.mrf.mxu0
        %v934 = vadd.f32 0.0, %v933
        %v935 = vpop.f32.mrf.mxu0
        %936 = vdwg.mxu0
        %v937 = vpack.c.bf16 %v934, %v934
        %v938 = vld [vmem:[%s5 + $0x10] sm:$0xff]
        %v939 = vpack.c.bf16 %v938, %v938
        %v941 = vsel %vm703, %v937, 0
        %v944 = vsel %vm747, %v939, 0
        %946 = vmatpush.bf16.msra.mxu0 0
        %947 = vmatpush.bf16.msra.mxu0 0
        %948 = vmatpush.bf16.msra.mxu0 0
        %949 = vmatpush.bf16.msra.mxu0 0
        %950 = vmatpush.bf16.msra.mxu0 0
        %951 = vmatpush.bf16.msra.mxu0 0
        %952 = vmatpush.bf16.msra.mxu0 0
        %953 = vmatpush.bf16.msra.mxu0 %v944
        %954 = vmatmul.bf16.gmra.mxu0 %v941
        %v955 = vpop.f32.mrf.mxu0
        %v956 = vadd.f32 0.0, %v955
        %v957 = vpop.f32.mrf.mxu0
        %958 = vdwg.mxu0
        %v959 = vadd.f32 %v870, %v956
        %960 = vrot.lane.b32.xlu0 %v694, 104
        %v961 = vpop.permute.xlu0 %960
        %962 = vrot.lane.b32.xlu0 %v695, 72
        %v963 = vpop.permute.xlu0 %962
        %964 = vrot.lane.b32.xlu0 %v696, 72
        %v965 = vpop.permute.xlu0 %964
        %v967 = vsel %vm703, %v961, 0
        %v970 = vsel %vm703, %v963, 0
        %v973 = vsel %vm703, %v965, 0
        %975 = vmatpush.bf16.xpose.msra.mxu0 0
        %976 = vmatpush.bf16.xpose.msra.mxu0 0
        %977 = vmatpush.bf16.xpose.msra.mxu0 0
        %978 = vmatpush.bf16.xpose.msra.mxu0 0
        %979 = vmatpush.bf16.xpose.msra.mxu0 0
        %980 = vmatpush.bf16.xpose.msra.mxu0 0
        %981 = vmatpush.bf16.xpose.msra.mxu0 %v973
        %982 = vmatpush.bf16.xpose.msra.mxu0 %v970
        %983 = vmatmul.bf16.gmra.mxu0 %v967
        %v984 = vpop.f32.mrf.mxu0
        %v985 = vadd.f32 %v693, %v984
        %v986 = vpop.f32.mrf.mxu0
        %987 = vdwg.mxu0
        %v988 = vsel %vm726, %v985, -inf
        %989 = vmax.xlane.f32.xlu0 %v988
        %v990 = vpop.xlane.xlu0 %989
        %v991 = vsub.f32 %v985, %v990
        %v992 = vmul.f32 %v991, 1.442695
        %v993 = vpow.pop %v992
        %v994 = vsel %vm726, %v993, 0.0
        %995 = vadd.xlane.f32.xlu0 %v994
        %v996 = vpop.xlane.xlu0 %995
        %v997 = vrcp.pop %v996
        %v998 = vmul.f32 %v993, %v997
        %v999 = vpack.c.bf16 %v998, %v998
        %1000 = vrot.lane.b32.xlu0 %v695, 40
        %v1001 = vpop.permute.xlu0 %1000
        %1002 = vrot.lane.b32.xlu0 %v696, 40
        %v1003 = vpop.permute.xlu0 %1002
        %v1006 = vsel %vm726, %v999, 0
        %v1009 = vsel %vm747, %v1003, 0
        %1011 = vmatpush.bf16.msra.mxu0 0
        %1012 = vmatpush.bf16.msra.mxu0 0
        %1013 = vmatpush.bf16.msra.mxu0 0
        %1014 = vmatpush.bf16.msra.mxu0 0
        %1015 = vmatpush.bf16.msra.mxu0 0
        %1016 = vmatpush.bf16.msra.mxu0 0
        %1017 = vmatpush.bf16.msra.mxu0 %v1009
        %1018 = vmatpush.bf16.msra.mxu0 %v1001
        %1019 = vmatmul.bf16.gmra.mxu0 %v1006
        %v1020 = vpop.f32.mrf.mxu0
        %v1021 = vadd.f32 0.0, %v1020
        %v1022 = vpop.f32.mrf.mxu0
        %1023 = vdwg.mxu0
        %v1024 = vpack.c.bf16 %v1021, %v1021
        %v1025 = vld [vmem:[%s5 + $0x18] sm:$0xff]
        %v1026 = vpack.c.bf16 %v1025, %v1025
        %v1028 = vsel %vm703, %v1024, 0
        %v1031 = vsel %vm747, %v1026, 0
        %1033 = vmatpush.bf16.msra.mxu0 0
        %1034 = vmatpush.bf16.msra.mxu0 0
        %1035 = vmatpush.bf16.msra.mxu0 0
        %1036 = vmatpush.bf16.msra.mxu0 0
        %1037 = vmatpush.bf16.msra.mxu0 0
        %1038 = vmatpush.bf16.msra.mxu0 0
        %1039 = vmatpush.bf16.msra.mxu0 0
        %1040 = vmatpush.bf16.msra.mxu0 %v1031
        %1041 = vmatmul.bf16.gmra.mxu0 %v1028
        %v1042 = vpop.f32.mrf.mxu0
        %v1043 = vadd.f32 0.0, %v1042
        %v1044 = vpop.f32.mrf.mxu0
        %1045 = vdwg.mxu0
        %v1046 = vadd.f32 %v959, %v1043
        %v1047 = vadd.f32 %v656, %v1046
        %v1048 = vld [vmem:[%s6] sm:$0x1]
        %v1050 = vperm.slane %v1048, 0
        %v1052 = vadd.f32 %v1047, %v1050
        %v1053 = vld [vmem:[%s7] sm:$0x1]
        %v1054 = vld [vmem:[%s8] sm:$0x1]
        %vm1055 = vcmask 261120
        %v1056 = vsel %vm1055, %v1052, 0.0
        %1057 = vadd.xlane.f32.xlu0 %v1056
        %v1058 = vpop.xlane.xlu0 %1057
        %v1059 = vrcp.pop 32.0
        %v1060 = vmul.f32 32.0, %v1059
        %v1061 = vsub.f32 1.0, %v1060
        %v1062 = vmul.f32 %v1059, %v1061
        %v1063 = vadd.f32 %v1059, %v1062
        %vm1064 = vweird.f32 %v1059
        %v1065 = vsel %vm1064, %v1059, %v1063
        %v1066 = vmul.f32 %v1058, %v1065
        %v1067 = vsub.f32 %v1052, %v1066
        %v1068 = vmul.f32 %v1067, %v1067
        %v1069 = vsel %vm1055, %v1068, 0.0
        %1070 = vadd.xlane.f32.xlu0 %v1069
        %v1071 = vpop.xlane.xlu0 %1070
        %v1072 = vmul.f32 %v1071, %v1065
        %v1073 = vadd.f32 %v1072, 1e-05
        %v1074 = vrsqrt.pop %v1073
        %v1075 = vmul.f32 %v1074, %v1073
        %v1076 = vmul.f32 %v1075, %v1074
        %v1077 = vmul.f32 0.5, %v1076
        %v1078 = vsub.f32 1.5, %v1077
        %v1079 = vmul.f32 %v1074, %v1078
        %vm1080 = vweird.f32 %v1073
        %vm1081 = vweird.f32 %v1074
        %vm1082 = vmor %vm1080, %vm1081
        %v1083 = vsel %vm1082, %v1074, %v1079
        %v1084 = vmul.f32 %v1067, %v1083
        %v1086 = vperm.slane %v1053, 0
        %v1088 = vmul.f32 %v1084, %v1086
        %v1090 = vperm.slane %v1054, 0
        %v1092 = vadd.f32 %v1088, %v1090
        %v1093 = vpack.c.bf16 %v1092, %v1092
        %v1094 = vld [vmem:[#allocation8] sm:$0xf]
        %v1095 = vld [vmem:[#allocation8 + $0x4] sm:$0xf]
        %v1096 = vld [vmem:[#allocation8 + $0x8] sm:$0xf]
        %v1097 = vld [vmem:[#allocation8 + $0xc] sm:$0xf]
        %v1098 = vld [vmem:[%s10] sm:$0x1]
        %v1100 = vperm.slane %v1098, 0
        %v1106 = vunpack.c.l.b16 %v1094
        %v1107 = vunpack.c.l.b16 %v1095
        %v1108 = vunpack.c.l.b16 %v1096
        %v1109 = vunpack.c.l.b16 %v1097
        %v1110 = vpack.c.b16 %v1107, %v1106
        %v1111 = vpack.c.b16 %v1109, %v1108
        %v1115 = vsel %vm1055, %v1093, 0
        %1117 = vmatpush.bf16.msra.mxu0 0
        %1118 = vmatpush.bf16.msra.mxu0 0
        %1119 = vmatpush.bf16.msra.mxu0 0
        %1120 = vmatpush.bf16.msra.mxu0 0
        %1121 = vmatpush.bf16.msra.mxu0 0
        %1122 = vmatpush.bf16.msra.mxu0 0
        %1123 = vmatpush.bf16.msra.mxu0 %v1111
        %1124 = vmatpush.bf16.msra.mxu0 %v1110
        %1125 = vmatmul.bf16.gmra.mxu0 %v1115
        %v1126 = vpop.f32.mrf.mxu0
        %v1127 = vadd.f32 %v1100, %v1126
        %v1128 = vpop.f32.mrf.mxu0
        %1129 = vdwg.mxu0
        %v1130 = vmul.f32 %v1127, 0.5
        %v1131 = vmul.f32 %v1127, 0.044715
        %v1132 = vmul.f32 %v1131, %v1127
        %v1133 = vmul.f32 %v1132, %v1127
        %v1134 = vadd.f32 %v1127, %v1133
        %v1135 = vmul.f32 %v1134, 0.7978846
        %v1136 = vtanh.pop %v1135
        %v1137 = vadd.f32 %v1136, 1.0
        %v1138 = vmul.f32 %v1130, %v1137
        %v1139 = vpack.c.bf16 %v1138, %v1138
        %v1140 = vld [vmem:[%s11] sm:$0xf]
        %v1141 = vld [vmem:[%s11 + $0x4] sm:$0xf]
        %v1142 = vld [vmem:[%s11 + $0x8] sm:$0xf]
        %v1143 = vld [vmem:[%s11 + $0xc] sm:$0xf]
        %v1144 = vld [vmem:[%s11 + $0x10] sm:$0xf]
        %v1145 = vld [vmem:[%s11 + $0x14] sm:$0xf]
        %v1146 = vld [vmem:[%s11 + $0x18] sm:$0xf]
        %v1147 = vld [vmem:[%s11 + $0x1c] sm:$0xf]
        %v1148 = vld [vmem:[%s11 + $0x20] sm:$0xf]
        %v1149 = vld [vmem:[%s11 + $0x24] sm:$0xf]
        %v1150 = vld [vmem:[%s11 + $0x28] sm:$0xf]
        %v1151 = vld [vmem:[%s11 + $0x2c] sm:$0xf]
        %v1152 = vld [vmem:[%s11 + $0x30] sm:$0xf]
        %v1153 = vld [vmem:[%s11 + $0x34] sm:$0xf]
        %v1154 = vld [vmem:[%s11 + $0x38] sm:$0xf]
        %v1155 = vld [vmem:[%s11 + $0x3c] sm:$0xf]
        %v1156 = vld [vmem:[%s12] sm:$0x1]
        %v1158 = vperm.slane %v1156, 0
        %v1176 = vunpack.c.l.b16 %v1140
        %v1177 = vunpack.c.l.b16 %v1141
        %v1178 = vunpack.c.l.b16 %v1142
        %v1179 = vunpack.c.l.b16 %v1143
        %v1180 = vunpack.c.l.b16 %v1144
        %v1181 = vunpack.c.l.b16 %v1145
        %v1182 = vunpack.c.l.b16 %v1146
        %v1183 = vunpack.c.l.b16 %v1147
        %v1184 = vunpack.c.l.b16 %v1148
        %v1185 = vunpack.c.l.b16 %v1149
        %v1186 = vunpack.c.l.b16 %v1150
        %v1187 = vunpack.c.l.b16 %v1151
        %v1188 = vunpack.c.l.b16 %v1152
        %v1189 = vunpack.c.l.b16 %v1153
        %v1190 = vunpack.c.l.b16 %v1154
        %v1191 = vunpack.c.l.b16 %v1155
        %v1192 = vpack.c.b16 %v1177, %v1176
        %v1193 = vpack.c.b16 %v1179, %v1178
        %v1194 = vpack.c.b16 %v1181, %v1180
        %v1195 = vpack.c.b16 %v1183, %v1182
        %v1196 = vpack.c.b16 %v1185, %v1184
        %v1197 = vpack.c.b16 %v1187, %v1186
        %v1198 = vpack.c.b16 %v1189, %v1188
        %v1199 = vpack.c.b16 %v1191, %v1190
        %1208 = vmatpush.bf16.msra.mxu0 %v1199
        %1209 = vmatpush.bf16.msra.mxu0 %v1198
        %1210 = vmatpush.bf16.msra.mxu0 %v1197
        %1211 = vmatpush.bf16.msra.mxu0 %v1196
        %1212 = vmatpush.bf16.msra.mxu0 %v1195
        %1213 = vmatpush.bf16.msra.mxu0 %v1194
        %1214 = vmatpush.bf16.msra.mxu0 %v1193
        %1215 = vmatpush.bf16.msra.mxu0 %v1192
        %1216 = vmatmul.bf16.gmra.mxu0 %v1139
        %v1217 = vpop.f32.mrf.mxu0
        %v1218 = vadd.f32 %v1158, %v1217
        %v1219 = vpop.f32.mrf.mxu0
        %1220 = vdwg.mxu0
        %v1221 = vadd.f32 %v1052, %v1218
        %1222 = vst.msk [vmem:[%s495] sm:$0xff] %vm1055, %v1221
        %s1223 = sand.u32 %s329, 1
        %s1224 = scalar_lea.sflag [#allocation5], %s1223
        %s1225 = sand.u32 %s329, 1
        %s1226 = smul.addr %s1225, 8
        %s1227 = scalar_lea.vmem [#allocation9], %s1226
        // Predicated region
        $region89: #{tpu_custom_call.1} parent=71 // pred_check
          %p1228 = pneg %p339
        $region90: #{tpu_custom_call.1} parent=71 // pred_check_branch
          %1230 = sbr.rel (%p1228) target = $region92
        $region91: #{tpu_custom_call.1} parent=71 // pred_region
          %1232 = vsyncadd %s1224, 0
          %s1233 = smul.addr %s33, 3
          %s1234 = sadd.s32 %s34, %s1233
          %s1235 = smul.addr %s1234, 8
          %s1236 = scalar_lea.hbm %s13, %s1235
          %s1238 = sshll.u32 %s1227, 4
          %s1239 = int_to_ptr.vmem [resolvable:$true] %s1238
          %s1240 = sshll.u32 %s1236, 4
          %s1241 = int_to_ptr.hbm [resolvable:$true] %s1240
          %1243 = dma.vmem_to_hbm [thread:$0]  %s1239, 128, %s1241, %s1224
        $region92: #{tpu_custom_call.1} parent=71 // pred_fallthru
          _
      $region72: #{tpu_custom_call.1} parent=5 // pred_fallthru
        _
      %p1244 = scmp.le.s32.totalorder 2, %s24
      // Predicated region
      $region93: #{tpu_custom_call.1} parent=5 // pred_check
        %p1245 = pneg %p1244
      $region94: #{tpu_custom_call.1} parent=5 // pred_check_branch
        %1247 = sbr.rel (%p1245) target = $region96
      $region95: #{tpu_custom_call.1} parent=5 // pred_region
        %s1248 = ssub.s32 %s24, 2
        // Predicated region
        $region97: #{tpu_custom_call.1} parent=95 // pred_check
          %p1249 = pneg %p345
        $region98: #{tpu_custom_call.1} parent=95 // pred_check_branch
          %1251 = sbr.rel (%p1249) target = $region100
        $region99: #{tpu_custom_call.1} parent=95 // pred_region
          %s1252 = sand.u32 %s330, 1
          %s1253 = scalar_lea.sflag [#allocation5], %s1252
          %s1254 = sand.u32 %s330, 1
          %s1255 = smul.addr %s1254, 8
          %s1256 = scalar_lea.vmem [#allocation9], %s1255
          %1258 = dma.done %s1253, 128
        $region100: #{tpu_custom_call.1} parent=95 // pred_fallthru
          _
      $region96: #{tpu_custom_call.1} parent=5 // pred_fallthru
        _
    $region6: #{tpu_custom_call.1} parent=1 // loop_footer
      %s28 = sadd.s32 1, %s24
    $region7: #{tpu_custom_call.1} parent=1 // loop_footer_branch
      %23 = sbr.rel target = $region3
    $region8: #{tpu_custom_call.1} parent=1 // loop_exit
      _
    %1259 = vsyncpa [#allocation4], 1
    %s1260 = scalar_lea.sflag [#allocation4], 1
    %1261 = vsyncpa %s1260, 1
    %1262 = vsyncpa [#allocation7], 1
    %1263 = vsyncpa [#allocation5], 1
    %s1264 = scalar_lea.sflag [#allocation5], 1
    %1265 = vsyncpa %s1264, 1

</llo_original>
